<compile_context>
chip_gen: v5e
topology: v5e:2x2
jax: 0.10.0
libtpu: 0.0.40
codegen_flags: <defaults>
</compile_context>

<pallas_src>
import functools

import jax
import jax.numpy as jnp
from jax.experimental import pallas as pl
from jax.experimental.pallas import tpu as pltpu

NEG_SLOPE = 0.01
BN_EPS = 1e-5


def _leaky(x):
    return jnp.where(x >= 0.0, x, NEG_SLOPE * x)


# ----------------------------------------------------------------------------
# Single fused kernel: cv1 + cv2 + Bottleneck(cv1, 3x3 cv2, shortcut) + cv3
# Layout inside the kernel is channels-first: activations are (C, L), L = H*W.
# ----------------------------------------------------------------------------
def _c3_kernel(x_ref, mask_l_ref, mask_r_ref,
               w1_ref, b1_ref, w2_ref, b2_ref, wm1_ref, bm1_ref,
               w9_ref, bm2_ref, w3a_ref, w3b_ref, b3_ref,
               o_ref, tbuf_ref, slab_ref, *, H, W, lpad):
    L = H * W
    c_ = wm1_ref.shape[0]

    x = x_ref[0]                                      # (C1, L) channels-first

    # --- 1x1 convs (BN folded into weights) + bias + LeakyReLU --------------
    y1 = _leaky(jnp.dot(w1_ref[...], x, preferred_element_type=jnp.float32)
                + b1_ref[...])                        # C3.cv1        (c_, L)
    y2 = _leaky(jnp.dot(w2_ref[...], x, preferred_element_type=jnp.float32)
                + b2_ref[...])                        # C3.cv2        (c_, L)
    t = _leaky(jnp.dot(wm1_ref[...], y1, preferred_element_type=jnp.float32)
               + bm1_ref[...])                        # Bottleneck.cv1 (c_, L)

    # --- Bottleneck.cv2 : 3x3 conv, pad=1 ------------------------------------
    # Flat zero-haloed buffer.  Only the borders are re-zeroed every grid step
    # (scratch persists across grid iterations / megacore shards); the interior
    # store is lane-aligned (lpad is a multiple of 128).
    rpad = tbuf_ref.shape[1] - lpad - L
    tbuf_ref[:, :lpad] = jnp.zeros((c_, lpad), jnp.float32)
    tbuf_ref[:, lpad + L:] = jnp.zeros((c_, rpad), jnp.float32)
    tbuf_ref[:, lpad:lpad + L] = t

    # im2col slab (9*c_, L): 9 shifted ref-sliced views of the haloed buffer.
    # Vertical out-of-bounds taps land in the zero halo; horizontal edge taps
    # (which would wrap into the adjacent row) are zeroed with the masks.
    mask_l = mask_l_ref[...]                          # 0.0 at w == 0     else 1.0
    mask_r = mask_r_ref[...]                          # 0.0 at w == W - 1 else 1.0
    for ky in range(3):
        for kx in range(3):
            s = (ky - 1) * W + (kx - 1)
            tap = tbuf_ref[:, lpad + s:lpad + s + L]  # (c_, L)
            if kx == 0:
                tap = tap * mask_l
            elif kx == 2:
                tap = tap * mask_r
            i = ky * 3 + kx
            slab_ref[i * c_:(i + 1) * c_, :] = tap

    # One deep-K MXU matmul (K = 9*c_) + BN bias + LeakyReLU.
    z = _leaky(jnp.dot(w9_ref[...], slab_ref[...],
                       preferred_element_type=jnp.float32) + bm2_ref[...])

    # --- shortcut add + C3.cv3 as split-weight matmul (no concatenate) ------
    mb = y1 + z
    out = (jnp.dot(w3a_ref[...], mb, preferred_element_type=jnp.float32)
           + jnp.dot(w3b_ref[...], y2, preferred_element_type=jnp.float32)
           + b3_ref[...])
    o_ref[0] = _leaky(out).astype(o_ref.dtype)


def fused_c3(x_cf, mask_l, mask_r, p, H, W):
    """x_cf: (N, C1, H*W) channels-first flat; returns (N, C2, H*W)."""
    N, C1, L = x_cf.shape
    c_ = p['w1'].shape[0]
    C2 = p['w3a'].shape[0]
    lpad = pl.cdiv(W + 1, 128) * 128                  # aligned interior store

    kern = functools.partial(_c3_kernel, H=H, W=W, lpad=lpad)
    return pl.pallas_call(
        kern,
        out_shape=jax.ShapeDtypeStruct((N, C2, L), x_cf.dtype),
        grid_spec=pltpu.PrefetchScalarGridSpec(
            num_scalar_prefetch=0,
            grid=(N,),
            in_specs=[
                pl.BlockSpec((1, C1, L), lambda n: (n, 0, 0)),   # x
                pl.BlockSpec((1, L), lambda n: (0, 0)),          # mask_l
                pl.BlockSpec((1, L), lambda n: (0, 0)),          # mask_r
                pl.BlockSpec((c_, C1), lambda n: (0, 0)),        # w1
                pl.BlockSpec((c_, 1), lambda n: (0, 0)),         # b1
                pl.BlockSpec((c_, C1), lambda n: (0, 0)),        # w2
                pl.BlockSpec((c_, 1), lambda n: (0, 0)),         # b2
                pl.BlockSpec((c_, c_), lambda n: (0, 0)),        # wm1
                pl.BlockSpec((c_, 1), lambda n: (0, 0)),         # bm1
                pl.BlockSpec((c_, 9 * c_), lambda n: (0, 0)),    # w9
                pl.BlockSpec((c_, 1), lambda n: (0, 0)),         # bm2
                pl.BlockSpec((C2, c_), lambda n: (0, 0)),        # w3a
                pl.BlockSpec((C2, c_), lambda n: (0, 0)),        # w3b
                pl.BlockSpec((C2, 1), lambda n: (0, 0)),         # b3
            ],
            out_specs=pl.BlockSpec((1, C2, L), lambda n: (n, 0, 0)),
            scratch_shapes=[
                pltpu.VMEM((c_, lpad + L + W + 1), jnp.float32),  # haloed t
                pltpu.VMEM((9 * c_, L), jnp.float32),             # im2col slab
            ],
        ),
        compiler_params=pltpu.CompilerParams(
            dimension_semantics=("parallel",)),
    )(x_cf, mask_l, mask_r, p['w1'], p['b1'], p['w2'], p['b2'],
      p['wm1'], p['bm1'], p['w9'], p['bm2'], p['w3a'], p['w3b'], p['b3'])


# ----------------------------------------------------------------------------
# C3 forward: NCHW in / NCHW out, no transposes (channels-first throughout)
# ----------------------------------------------------------------------------
def c3_forward(x_nchw, params):
    N, C1, H, W = x_nchw.shape
    C2 = params['w3a'].shape[0]
    L = H * W
    x_cf = x_nchw.reshape(N, C1, L)                   # free reshape (no transpose)
    # Horizontal edge-column masks for the 3x3 conv taps.
    col = jnp.arange(L, dtype=jnp.int32) % W
    mask_l = (col != 0).astype(jnp.float32).reshape(1, L)
    mask_r = (col != W - 1).astype(jnp.float32).reshape(1, L)
    out = fused_c3(x_cf, mask_l, mask_r, params, H, W)
    return out.reshape(N, C2, H, W)


# ----------------------------------------------------------------------------
# Parameter preparation: fold eval-mode BatchNorm into the conv weights,
# oriented channels-first (out = W @ act).
# ----------------------------------------------------------------------------
def _fold_bn(r):
    scale = r['gamma'] * jax.lax.rsqrt(r['var'] + BN_EPS)
    bias = r['beta'] - r['mean'] * scale
    return scale, bias


def _fold_1x1(r):
    """OIHW (Cout,Cin,1,1) + BN -> (Cout, Cin) weight, (Cout, 1) bias."""
    scale, bias = _fold_bn(r)
    w = r['w_oihw'][:, :, 0, 0] * scale[:, None]
    return w.astype(jnp.float32), bias.reshape(-1, 1).astype(jnp.float32)


def prepare_params(raw):
    w1, b1 = _fold_1x1(raw['cv1'])
    w2, b2 = _fold_1x1(raw['cv2'])
    wm1, bm1 = _fold_1x1(raw['m_cv1'])
    w3, b3 = _fold_1x1(raw['cv3'])                    # (C2, 2c_)
    c_ = w1.shape[0]

    r = raw['m_cv2']
    scale, bm2 = _fold_bn(r)
    cout, cin = r['w_oihw'].shape[:2]
    # (Cout, Cin, 3, 3) -> (Cout, ky, kx, Cin) -> (Cout, 9*Cin); column block
    # (ky*3 + kx)*Cin matches the slab row order built in the kernel.
    w9 = jnp.transpose(r['w_oihw'] * scale[:, None, None, None],
                       (0, 2, 3, 1)).reshape(cout, 9 * cin).astype(jnp.float32)

    return dict(w1=w1, b1=b1, w2=w2, b2=b2, wm1=wm1, bm1=bm1,
                w9=w9, bm2=bm2.reshape(-1, 1).astype(jnp.float32),
                w3a=w3[:, :c_], w3b=w3[:, c_:], b3=b3)


# ----------------------------------------------------------------------------
# Deterministic parameter construction (mimics PyTorch OIHW conv + BN stats)
# ----------------------------------------------------------------------------
def make_conv_params(key, cin, cout, k):
    kw, kg, kb, km, kv = jax.random.split(key, 5)
    return dict(
        w_oihw=0.1 * jax.random.normal(kw, (cout, cin, k, k), jnp.float32),
        gamma=1.0 + 0.1 * jax.random.normal(kg, (cout,), jnp.float32),
        beta=0.05 * jax.random.normal(kb, (cout,), jnp.float32),
        mean=0.1 * jax.random.normal(km, (cout,), jnp.float32),
        var=jax.random.uniform(kv, (cout,), jnp.float32, 0.5, 1.5),
    )


# ----------------------------------------------------------------------------
# Pure-JAX reference (for correctness checking only)
# ----------------------------------------------------------------------------
def _ref_conv_bn_act(x_nhwc, p, pad):
    w_hwio = jnp.transpose(p['w_oihw'], (2, 3, 1, 0))
    y = jax.lax.conv_general_dilated(
        x_nhwc, w_hwio, window_strides=(1, 1),
        padding=[(pad, pad), (pad, pad)],
        dimension_numbers=('NHWC', 'HWIO', 'NHWC'),
        precision=jax.lax.Precision.HIGHEST)
    scale = p['gamma'] * jax.lax.rsqrt(p['var'] + BN_EPS)
    bias = p['beta'] - p['mean'] * scale
    y = y * scale + bias
    return jnp.where(y >= 0.0, y, NEG_SLOPE * y)


def c3_reference(x_nchw, raw):
    x = jnp.transpose(x_nchw, (0, 2, 3, 1))
    y1 = _ref_conv_bn_act(x, raw['cv1'], 0)
    t = _ref_conv_bn_act(y1, raw['m_cv1'], 0)
    t = _ref_conv_bn_act(t, raw['m_cv2'], 1)
    mb = y1 + t
    y2 = _ref_conv_bn_act(x, raw['cv2'], 0)
    cat = jnp.concatenate([mb, y2], axis=-1)
    out = _ref_conv_bn_act(cat, raw['cv3'], 0)
    return jnp.transpose(out, (0, 3, 1, 2))


if __name__ == "__main__":
    key = jax.random.PRNGKey(0)
    N, C1, C2, H, W = 2, 16, 16, 16, 16
    c_ = int(C2 * 0.5)

    kx, k1, k2, k3, k4, k5 = jax.random.split(key, 6)
    x = jax.random.normal(kx, (N, C1, H, W), jnp.float32)

    raw = {
        'cv1': make_conv_params(k1, C1, c_, 1),
        'cv2': make_conv_params(k2, C1, c_, 1),
        'cv3': make_conv_params(k3, 2 * c_, C2, 1),
        'm_cv1': make_conv_params(k4, c_, c_, 1),
        'm_cv2': make_conv_params(k5, c_, c_, 3),
    }
    params = prepare_params(raw)

    out = jax.block_until_ready(c3_forward(x, params))
    ref = c3_reference(x, raw)

    assert out.shape == (N, C2, H, W), out.shape
    max_err = float(jnp.max(jnp.abs(out - ref)))
    assert jnp.allclose(out, ref, rtol=1e-3, atol=1e-3), max_err

    print("KERNEL_OK")
</pallas_src>

<mosaic_0001>
module attributes {stable_mosaic.version = 11 : i64} {
  func.func @_c3_kernel(%arg0: i32, %arg1: memref<1x16x256xf32, #tpu.memory_space<vmem>>, %arg2: memref<1x256xf32, #tpu.memory_space<vmem>>, %arg3: memref<1x256xf32, #tpu.memory_space<vmem>>, %arg4: memref<8x16xf32, #tpu.memory_space<vmem>>, %arg5: memref<8x1xf32, #tpu.memory_space<vmem>>, %arg6: memref<8x16xf32, #tpu.memory_space<vmem>>, %arg7: memref<8x1xf32, #tpu.memory_space<vmem>>, %arg8: memref<8x8xf32, #tpu.memory_space<vmem>>, %arg9: memref<8x1xf32, #tpu.memory_space<vmem>>, %arg10: memref<8x72xf32, #tpu.memory_space<vmem>>, %arg11: memref<8x1xf32, #tpu.memory_space<vmem>>, %arg12: memref<16x8xf32, #tpu.memory_space<vmem>>, %arg13: memref<16x8xf32, #tpu.memory_space<vmem>>, %arg14: memref<16x1xf32, #tpu.memory_space<vmem>>, %arg15: memref<1x16x256xf32, #tpu.memory_space<vmem>>, %arg16: memref<8x401xf32, #tpu.memory_space<vmem>>, %arg17: memref<72x256xf32, #tpu.memory_space<vmem>>) attributes {dimension_semantics = [#tpu.dimension_semantics<parallel>], iteration_bounds = array<i64: 2>, scalar_prefetch = 0 : i64, scratch_operands = 2 : i64, tpu.core_type = #tpu.core_type<tc>, window_params = [{transform_indices = @transform_0, window_bounds = array<i64: 1, 16, 256>}, {pipeline_mode = #tpu.pipeline_mode<synchronous>, transform_indices = @transform_1, window_bounds = array<i64: 1, 256>}, {pipeline_mode = #tpu.pipeline_mode<synchronous>, transform_indices = @transform_2, window_bounds = array<i64: 1, 256>}, {pipeline_mode = #tpu.pipeline_mode<synchronous>, transform_indices = @transform_3, window_bounds = array<i64: 8, 16>}, {pipeline_mode = #tpu.pipeline_mode<synchronous>, transform_indices = @transform_4, window_bounds = array<i64: 8, 1>}, {pipeline_mode = #tpu.pipeline_mode<synchronous>, transform_indices = @transform_5, window_bounds = array<i64: 8, 16>}, {pipeline_mode = #tpu.pipeline_mode<synchronous>, transform_indices = @transform_6, window_bounds = array<i64: 8, 1>}, {pipeline_mode = #tpu.pipeline_mode<synchronous>, transform_indices = @transform_7, window_bounds = array<i64: 8, 8>}, {pipeline_mode = #tpu.pipeline_mode<synchronous>, transform_indices = @transform_8, window_bounds = array<i64: 8, 1>}, {pipeline_mode = #tpu.pipeline_mode<synchronous>, transform_indices = @transform_9, window_bounds = array<i64: 8, 72>}, {pipeline_mode = #tpu.pipeline_mode<synchronous>, transform_indices = @transform_10, window_bounds = array<i64: 8, 1>}, {pipeline_mode = #tpu.pipeline_mode<synchronous>, transform_indices = @transform_11, window_bounds = array<i64: 16, 8>}, {pipeline_mode = #tpu.pipeline_mode<synchronous>, transform_indices = @transform_12, window_bounds = array<i64: 16, 8>}, {pipeline_mode = #tpu.pipeline_mode<synchronous>, transform_indices = @transform_13, window_bounds = array<i64: 16, 1>}, {transform_indices = @transform_14, window_bounds = array<i64: 1, 16, 256>}]} {
    %c0 = arith.constant 0 : index
    %c0_0 = arith.constant 0 : index
    %c0_1 = arith.constant 0 : index
    %0 = vector.load %arg1[%c0, %c0_0, %c0_1] : memref<1x16x256xf32, #tpu.memory_space<vmem>>, vector<1x16x256xf32>
    %1 = vector.shape_cast %0 : vector<1x16x256xf32> to vector<16x256xf32>
    %c0_2 = arith.constant 0 : index
    %c0_3 = arith.constant 0 : index
    %2 = vector.load %arg4[%c0_2, %c0_3] : memref<8x16xf32, #tpu.memory_space<vmem>>, vector<8x16xf32>
    %cst = arith.constant dense<0.000000e+00> : vector<8x256xf32>
    %3 = tpu.matmul %2, %1, %cst {dimension_numbers = #tpu.dot_dimension_numbers<[1], [0], [0], [1], [0, 0, 1, 1], [], []>} : vector<8x16xf32>, vector<16x256xf32>, vector<8x256xf32> -> vector<8x256xf32>
    %c0_4 = arith.constant 0 : index
    %c0_5 = arith.constant 0 : index
    %4 = vector.load %arg5[%c0_4, %c0_5] : memref<8x1xf32, #tpu.memory_space<vmem>>, vector<8x1xf32>
    %5 = vector.broadcast %4 : vector<8x1xf32> to vector<8x256xf32>
    %6 = arith.addf %3, %5 : vector<8x256xf32>
    %cst_6 = arith.constant 0.000000e+00 : f32
    %7 = vector.broadcast %cst_6 : f32 to vector<8x256xf32>
    %8 = arith.cmpf oge, %6, %7 : vector<8x256xf32>
    %cst_7 = arith.constant 0.00999999977 : f32
    %9 = vector.broadcast %cst_7 : f32 to vector<8x256xf32>
    %10 = arith.mulf %9, %6 : vector<8x256xf32>
    %11 = arith.select %8, %6, %10 : vector<8x256xi1>, vector<8x256xf32>
    %c0_8 = arith.constant 0 : index
    %c0_9 = arith.constant 0 : index
    %12 = vector.load %arg6[%c0_8, %c0_9] : memref<8x16xf32, #tpu.memory_space<vmem>>, vector<8x16xf32>
    %cst_10 = arith.constant dense<0.000000e+00> : vector<8x256xf32>
    %13 = tpu.matmul %12, %1, %cst_10 {dimension_numbers = #tpu.dot_dimension_numbers<[1], [0], [0], [1], [0, 0, 1, 1], [], []>} : vector<8x16xf32>, vector<16x256xf32>, vector<8x256xf32> -> vector<8x256xf32>
    %c0_11 = arith.constant 0 : index
    %c0_12 = arith.constant 0 : index
    %14 = vector.load %arg7[%c0_11, %c0_12] : memref<8x1xf32, #tpu.memory_space<vmem>>, vector<8x1xf32>
    %15 = vector.broadcast %14 : vector<8x1xf32> to vector<8x256xf32>
    %16 = arith.addf %13, %15 : vector<8x256xf32>
    %cst_13 = arith.constant 0.000000e+00 : f32
    %17 = vector.broadcast %cst_13 : f32 to vector<8x256xf32>
    %18 = arith.cmpf oge, %16, %17 : vector<8x256xf32>
    %cst_14 = arith.constant 0.00999999977 : f32
    %19 = vector.broadcast %cst_14 : f32 to vector<8x256xf32>
    %20 = arith.mulf %19, %16 : vector<8x256xf32>
    %21 = arith.select %18, %16, %20 : vector<8x256xi1>, vector<8x256xf32>
    %c0_15 = arith.constant 0 : index
    %c0_16 = arith.constant 0 : index
    %22 = vector.load %arg8[%c0_15, %c0_16] : memref<8x8xf32, #tpu.memory_space<vmem>>, vector<8x8xf32>
    %cst_17 = arith.constant dense<0.000000e+00> : vector<8x256xf32>
    %23 = tpu.matmul %22, %11, %cst_17 {dimension_numbers = #tpu.dot_dimension_numbers<[1], [0], [0], [1], [0, 0, 1, 1], [], []>} : vector<8x8xf32>, vector<8x256xf32>, vector<8x256xf32> -> vector<8x256xf32>
    %c0_18 = arith.constant 0 : index
    %c0_19 = arith.constant 0 : index
    %24 = vector.load %arg9[%c0_18, %c0_19] : memref<8x1xf32, #tpu.memory_space<vmem>>, vector<8x1xf32>
    %25 = vector.broadcast %24 : vector<8x1xf32> to vector<8x256xf32>
    %26 = arith.addf %23, %25 : vector<8x256xf32>
    %cst_20 = arith.constant 0.000000e+00 : f32
    %27 = vector.broadcast %cst_20 : f32 to vector<8x256xf32>
    %28 = arith.cmpf oge, %26, %27 : vector<8x256xf32>
    %cst_21 = arith.constant 0.00999999977 : f32
    %29 = vector.broadcast %cst_21 : f32 to vector<8x256xf32>
    %30 = arith.mulf %29, %26 : vector<8x256xf32>
    %31 = arith.select %28, %26, %30 : vector<8x256xi1>, vector<8x256xf32>
    %cst_22 = arith.constant 0.000000e+00 : f32
    %32 = vector.broadcast %cst_22 : f32 to vector<8x128xf32>
    %c0_23 = arith.constant 0 : index
    %c0_24 = arith.constant 0 : index
    %33 = vector.load %arg16[%c0_23, %c0_24] : memref<8x401xf32, #tpu.memory_space<vmem>>, vector<8x128xf32>
    tpu.vector_store %arg16[%c0_23, %c0_24], %32 {strides = array<i32>} : memref<8x401xf32, #tpu.memory_space<vmem>>, vector<8x128xf32>,
    %cst_25 = arith.constant 0.000000e+00 : f32
    %34 = vector.broadcast %cst_25 : f32 to vector<8x17xf32>
    %c0_26 = arith.constant 0 : index
    %c384 = arith.constant 384 : index
    %35 = vector.load %arg16[%c0_26, %c384] : memref<8x401xf32, #tpu.memory_space<vmem>>, vector<8x17xf32>
    tpu.vector_store %arg16[%c0_26, %c384], %34 {strides = array<i32>} : memref<8x401xf32, #tpu.memory_space<vmem>>, vector<8x17xf32>,
    %c0_27 = arith.constant 0 : index
    %c128 = arith.constant 128 : index
    %36 = vector.load %arg16[%c0_27, %c128] : memref<8x401xf32, #tpu.memory_space<vmem>>, vector<8x256xf32>
    tpu.vector_store %arg16[%c0_27, %c128], %31 {strides = array<i32>} : memref<8x401xf32, #tpu.memory_space<vmem>>, vector<8x256xf32>,
    %c0_28 = arith.constant 0 : index
    %c0_29 = arith.constant 0 : index
    %37 = vector.load %arg2[%c0_28, %c0_29] : memref<1x256xf32, #tpu.memory_space<vmem>>, vector<1x256xf32>
    %c0_30 = arith.constant 0 : index
    %c0_31 = arith.constant 0 : index
    %38 = vector.load %arg3[%c0_30, %c0_31] : memref<1x256xf32, #tpu.memory_space<vmem>>, vector<1x256xf32>
    %c0_32 = arith.constant 0 : index
    %c111 = arith.constant 111 : index
    %39 = vector.load %arg16[%c0_32, %c111] : memref<8x401xf32, #tpu.memory_space<vmem>>, vector<8x256xf32>
    %40 = vector.broadcast %37 : vector<1x256xf32> to vector<8x256xf32>
    %41 = arith.mulf %39, %40 : vector<8x256xf32>
    %c0_33 = arith.constant 0 : index
    %c0_34 = arith.constant 0 : index
    %42 = vector.load %arg17[%c0_33, %c0_34] : memref<72x256xf32, #tpu.memory_space<vmem>>, vector<8x256xf32>
    tpu.vector_store %arg17[%c0_33, %c0_34], %41 {strides = array<i32>} : memref<72x256xf32, #tpu.memory_space<vmem>>, vector<8x256xf32>,
    %c0_35 = arith.constant 0 : index
    %c112 = arith.constant 112 : index
    %43 = vector.load %arg16[%c0_35, %c112] : memref<8x401xf32, #tpu.memory_space<vmem>>, vector<8x256xf32>
    %c8 = arith.constant 8 : index
    %c0_36 = arith.constant 0 : index
    %44 = vector.load %arg17[%c8, %c0_36] : memref<72x256xf32, #tpu.memory_space<vmem>>, vector<8x256xf32>
    tpu.vector_store %arg17[%c8, %c0_36], %43 {strides = array<i32>} : memref<72x256xf32, #tpu.memory_space<vmem>>, vector<8x256xf32>,
    %c0_37 = arith.constant 0 : index
    %c113 = arith.constant 113 : index
    %45 = vector.load %arg16[%c0_37, %c113] : memref<8x401xf32, #tpu.memory_space<vmem>>, vector<8x256xf32>
    %46 = vector.broadcast %38 : vector<1x256xf32> to vector<8x256xf32>
    %47 = arith.mulf %45, %46 : vector<8x256xf32>
    %c16 = arith.constant 16 : index
    %c0_38 = arith.constant 0 : index
    %48 = vector.load %arg17[%c16, %c0_38] : memref<72x256xf32, #tpu.memory_space<vmem>>, vector<8x256xf32>
    tpu.vector_store %arg17[%c16, %c0_38], %47 {strides = array<i32>} : memref<72x256xf32, #tpu.memory_space<vmem>>, vector<8x256xf32>,
    %c0_39 = arith.constant 0 : index
    %c127 = arith.constant 127 : index
    %49 = vector.load %arg16[%c0_39, %c127] : memref<8x401xf32, #tpu.memory_space<vmem>>, vector<8x256xf32>
    %50 = vector.broadcast %37 : vector<1x256xf32> to vector<8x256xf32>
    %51 = arith.mulf %49, %50 : vector<8x256xf32>
    %c24 = arith.constant 24 : index
    %c0_40 = arith.constant 0 : index
    %52 = vector.load %arg17[%c24, %c0_40] : memref<72x256xf32, #tpu.memory_space<vmem>>, vector<8x256xf32>
    tpu.vector_store %arg17[%c24, %c0_40], %51 {strides = array<i32>} : memref<72x256xf32, #tpu.memory_space<vmem>>, vector<8x256xf32>,
    %c0_41 = arith.constant 0 : index
    %c128_42 = arith.constant 128 : index
    %53 = vector.load %arg16[%c0_41, %c128_42] : memref<8x401xf32, #tpu.memory_space<vmem>>, vector<8x256xf32>
    %c32 = arith.constant 32 : index
    %c0_43 = arith.constant 0 : index
    %54 = vector.load %arg17[%c32, %c0_43] : memref<72x256xf32, #tpu.memory_space<vmem>>, vector<8x256xf32>
    tpu.vector_store %arg17[%c32, %c0_43], %53 {strides = array<i32>} : memref<72x256xf32, #tpu.memory_space<vmem>>, vector<8x256xf32>,
    %c0_44 = arith.constant 0 : index
    %c129 = arith.constant 129 : index
    %55 = vector.load %arg16[%c0_44, %c129] : memref<8x401xf32, #tpu.memory_space<vmem>>, vector<8x256xf32>
    %56 = vector.broadcast %38 : vector<1x256xf32> to vector<8x256xf32>
    %57 = arith.mulf %55, %56 : vector<8x256xf32>
    %c40 = arith.constant 40 : index
    %c0_45 = arith.constant 0 : index
    %58 = vector.load %arg17[%c40, %c0_45] : memref<72x256xf32, #tpu.memory_space<vmem>>, vector<8x256xf32>
    tpu.vector_store %arg17[%c40, %c0_45], %57 {strides = array<i32>} : memref<72x256xf32, #tpu.memory_space<vmem>>, vector<8x256xf32>,
    %c0_46 = arith.constant 0 : index
    %c143 = arith.constant 143 : index
    %59 = vector.load %arg16[%c0_46, %c143] : memref<8x401xf32, #tpu.memory_space<vmem>>, vector<8x256xf32>
    %60 = vector.broadcast %37 : vector<1x256xf32> to vector<8x256xf32>
    %61 = arith.mulf %59, %60 : vector<8x256xf32>
    %c48 = arith.constant 48 : index
    %c0_47 = arith.constant 0 : index
    %62 = vector.load %arg17[%c48, %c0_47] : memref<72x256xf32, #tpu.memory_space<vmem>>, vector<8x256xf32>
    tpu.vector_store %arg17[%c48, %c0_47], %61 {strides = array<i32>} : memref<72x256xf32, #tpu.memory_space<vmem>>, vector<8x256xf32>,
    %c0_48 = arith.constant 0 : index
    %c144 = arith.constant 144 : index
    %63 = vector.load %arg16[%c0_48, %c144] : memref<8x401xf32, #tpu.memory_space<vmem>>, vector<8x256xf32>
    %c56 = arith.constant 56 : index
    %c0_49 = arith.constant 0 : index
    %64 = vector.load %arg17[%c56, %c0_49] : memref<72x256xf32, #tpu.memory_space<vmem>>, vector<8x256xf32>
    tpu.vector_store %arg17[%c56, %c0_49], %63 {strides = array<i32>} : memref<72x256xf32, #tpu.memory_space<vmem>>, vector<8x256xf32>,
    %c0_50 = arith.constant 0 : index
    %c145 = arith.constant 145 : index
    %65 = vector.load %arg16[%c0_50, %c145] : memref<8x401xf32, #tpu.memory_space<vmem>>, vector<8x256xf32>
    %66 = vector.broadcast %38 : vector<1x256xf32> to vector<8x256xf32>
    %67 = arith.mulf %65, %66 : vector<8x256xf32>
    %c64 = arith.constant 64 : index
    %c0_51 = arith.constant 0 : index
    %68 = vector.load %arg17[%c64, %c0_51] : memref<72x256xf32, #tpu.memory_space<vmem>>, vector<8x256xf32>
    tpu.vector_store %arg17[%c64, %c0_51], %67 {strides = array<i32>} : memref<72x256xf32, #tpu.memory_space<vmem>>, vector<8x256xf32>,
    %c0_52 = arith.constant 0 : index
    %c0_53 = arith.constant 0 : index
    %69 = vector.load %arg10[%c0_52, %c0_53] : memref<8x72xf32, #tpu.memory_space<vmem>>, vector<8x72xf32>
    %c0_54 = arith.constant 0 : index
    %c0_55 = arith.constant 0 : index
    %70 = vector.load %arg17[%c0_54, %c0_55] : memref<72x256xf32, #tpu.memory_space<vmem>>, vector<72x256xf32>
    %cst_56 = arith.constant dense<0.000000e+00> : vector<8x256xf32>
    %71 = tpu.matmul %69, %70, %cst_56 {dimension_numbers = #tpu.dot_dimension_numbers<[1], [0], [0], [1], [0, 0, 1, 1], [], []>} : vector<8x72xf32>, vector<72x256xf32>, vector<8x256xf32> -> vector<8x256xf32>
    %c0_57 = arith.constant 0 : index
    %c0_58 = arith.constant 0 : index
    %72 = vector.load %arg11[%c0_57, %c0_58] : memref<8x1xf32, #tpu.memory_space<vmem>>, vector<8x1xf32>
    %73 = vector.broadcast %72 : vector<8x1xf32> to vector<8x256xf32>
    %74 = arith.addf %71, %73 : vector<8x256xf32>
    %cst_59 = arith.constant 0.000000e+00 : f32
    %75 = vector.broadcast %cst_59 : f32 to vector<8x256xf32>
    %76 = arith.cmpf oge, %74, %75 : vector<8x256xf32>
    %cst_60 = arith.constant 0.00999999977 : f32
    %77 = vector.broadcast %cst_60 : f32 to vector<8x256xf32>
    %78 = arith.mulf %77, %74 : vector<8x256xf32>
    %79 = arith.select %76, %74, %78 : vector<8x256xi1>, vector<8x256xf32>
    %80 = arith.addf %11, %79 : vector<8x256xf32>
    %c0_61 = arith.constant 0 : index
    %c0_62 = arith.constant 0 : index
    %81 = vector.load %arg12[%c0_61, %c0_62] : memref<16x8xf32, #tpu.memory_space<vmem>>, vector<16x8xf32>
    %cst_63 = arith.constant dense<0.000000e+00> : vector<16x256xf32>
    %82 = tpu.matmul %81, %80, %cst_63 {dimension_numbers = #tpu.dot_dimension_numbers<[1], [0], [0], [1], [0, 0, 1, 1], [], []>} : vector<16x8xf32>, vector<8x256xf32>, vector<16x256xf32> -> vector<16x256xf32>
    %c0_64 = arith.constant 0 : index
    %c0_65 = arith.constant 0 : index
    %83 = vector.load %arg13[%c0_64, %c0_65] : memref<16x8xf32, #tpu.memory_space<vmem>>, vector<16x8xf32>
    %cst_66 = arith.constant dense<0.000000e+00> : vector<16x256xf32>
    %84 = tpu.matmul %83, %21, %cst_66 {dimension_numbers = #tpu.dot_dimension_numbers<[1], [0], [0], [1], [0, 0, 1, 1], [], []>} : vector<16x8xf32>, vector<8x256xf32>, vector<16x256xf32> -> vector<16x256xf32>
    %85 = arith.addf %82, %84 : vector<16x256xf32>
    %c0_67 = arith.constant 0 : index
    %c0_68 = arith.constant 0 : index
    %86 = vector.load %arg14[%c0_67, %c0_68] : memref<16x1xf32, #tpu.memory_space<vmem>>, vector<16x1xf32>
    %87 = vector.broadcast %86 : vector<16x1xf32> to vector<16x256xf32>
    %88 = arith.addf %85, %87 : vector<16x256xf32>
    %cst_69 = arith.constant 0.000000e+00 : f32
    %89 = vector.broadcast %cst_69 : f32 to vector<16x256xf32>
    %90 = arith.cmpf oge, %88, %89 : vector<16x256xf32>
    %cst_70 = arith.constant 0.00999999977 : f32
    %91 = vector.broadcast %cst_70 : f32 to vector<16x256xf32>
    %92 = arith.mulf %91, %88 : vector<16x256xf32>
    %93 = arith.select %90, %88, %92 : vector<16x256xi1>, vector<16x256xf32>
    %c0_71 = arith.constant 0 : index
    %c0_72 = arith.constant 0 : index
    %c0_73 = arith.constant 0 : index
    %94 = vector.load %arg15[%c0_71, %c0_72, %c0_73] : memref<1x16x256xf32, #tpu.memory_space<vmem>>, vector<1x16x256xf32>
    %95 = vector.shape_cast %94 : vector<1x16x256xf32> to vector<16x256xf32>
    %96 = vector.shape_cast %93 : vector<16x256xf32> to vector<1x16x256xf32>
    tpu.vector_store %arg15[%c0_71, %c0_72, %c0_73], %96 {strides = array<i32>} : memref<1x16x256xf32, #tpu.memory_space<vmem>>, vector<1x16x256xf32>,
    return
  }
  func.func @transform_0(%arg0: i32) -> (i32, i32, i32) {
    %c0_i32 = arith.constant 0 : i32
    %c0_i32_0 = arith.constant 0 : i32
    %c0_i32_1 = arith.constant 0 : i32
    return %arg0, %c0_i32, %c0_i32_0 : i32, i32, i32
  }
  func.func @transform_1(%arg0: i32) -> (i32, i32) {
    %c0_i32 = arith.constant 0 : i32
    %c0_i32_0 = arith.constant 0 : i32
    %c0_i32_1 = arith.constant 0 : i32
    return %c0_i32, %c0_i32_0 : i32, i32
  }
  func.func @transform_2(%arg0: i32) -> (i32, i32) {
    %c0_i32 = arith.constant 0 : i32
    %c0_i32_0 = arith.constant 0 : i32
    %c0_i32_1 = arith.constant 0 : i32
    return %c0_i32, %c0_i32_0 : i32, i32
  }
  func.func @transform_3(%arg0: i32) -> (i32, i32) {
    %c0_i32 = arith.constant 0 : i32
    %c0_i32_0 = arith.constant 0 : i32
    %c0_i32_1 = arith.constant 0 : i32
    return %c0_i32, %c0_i32_0 : i32, i32
  }
  func.func @transform_4(%arg0: i32) -> (i32, i32) {
    %c0_i32 = arith.constant 0 : i32
    %c0_i32_0 = arith.constant 0 : i32
    %c0_i32_1 = arith.constant 0 : i32
    return %c0_i32, %c0_i32_0 : i32, i32
  }
  func.func @transform_5(%arg0: i32) -> (i32, i32) {
    %c0_i32 = arith.constant 0 : i32
    %c0_i32_0 = arith.constant 0 : i32
    %c0_i32_1 = arith.constant 0 : i32
    return %c0_i32, %c0_i32_0 : i32, i32
  }
  func.func @transform_6(%arg0: i32) -> (i32, i32) {
    %c0_i32 = arith.constant 0 : i32
    %c0_i32_0 = arith.constant 0 : i32
    %c0_i32_1 = arith.constant 0 : i32
    return %c0_i32, %c0_i32_0 : i32, i32
  }
  func.func @transform_7(%arg0: i32) -> (i32, i32) {
    %c0_i32 = arith.constant 0 : i32
    %c0_i32_0 = arith.constant 0 : i32
    %c0_i32_1 = arith.constant 0 : i32
    return %c0_i32, %c0_i32_0 : i32, i32
  }
  func.func @transform_8(%arg0: i32) -> (i32, i32) {
    %c0_i32 = arith.constant 0 : i32
    %c0_i32_0 = arith.constant 0 : i32
    %c0_i32_1 = arith.constant 0 : i32
    return %c0_i32, %c0_i32_0 : i32, i32
  }
  func.func @transform_9(%arg0: i32) -> (i32, i32) {
    %c0_i32 = arith.constant 0 : i32
    %c0_i32_0 = arith.constant 0 : i32
    %c0_i32_1 = arith.constant 0 : i32
    return %c0_i32, %c0_i32_0 : i32, i32
  }
  func.func @transform_10(%arg0: i32) -> (i32, i32) {
    %c0_i32 = arith.constant 0 : i32
    %c0_i32_0 = arith.constant 0 : i32
    %c0_i32_1 = arith.constant 0 : i32
    return %c0_i32, %c0_i32_0 : i32, i32
  }
  func.func @transform_11(%arg0: i32) -> (i32, i32) {
    %c0_i32 = arith.constant 0 : i32
    %c0_i32_0 = arith.constant 0 : i32
    %c0_i32_1 = arith.constant 0 : i32
    return %c0_i32, %c0_i32_0 : i32, i32
  }
  func.func @transform_12(%arg0: i32) -> (i32, i32) {
    %c0_i32 = arith.constant 0 : i32
    %c0_i32_0 = arith.constant 0 : i32
    %c0_i32_1 = arith.constant 0 : i32
    return %c0_i32, %c0_i32_0 : i32, i32
  }
  func.func @transform_13(%arg0: i32) -> (i32, i32) {
    %c0_i32 = arith.constant 0 : i32
    %c0_i32_0 = arith.constant 0 : i32
    %c0_i32_1 = arith.constant 0 : i32
    return %c0_i32, %c0_i32_0 : i32, i32
  }
  func.func @transform_14(%arg0: i32) -> (i32, i32, i32) {
    %c0_i32 = arith.constant 0 : i32
    %c0_i32_0 = arith.constant 0 : i32
    %c0_i32_1 = arith.constant 0 : i32
    return %arg0, %c0_i32, %c0_i32_0 : i32, i32, i32
  }
}

</mosaic_0001>

<llo_original>
// kernel: tpu_custom_call.1
$region0: #{tpu_custom_call.1}
  #allocation0 [shape = 'u32[]', space=smem, size = 0x4, offset = 0x4, fixed_abs, tag = 'smem constant byte address 0x4 - core index']
  #allocation1 [shape = 'u32[72,128]{1,0:T(1,128)}', space=vmem, size = 0x9000, scoped, tag = 'internal scratch']
  #allocation2 [shape = 'f32[8,401]{1,0:T(8,128)}', space=vmem, size = 0x4000, scoped, tag = 'scratch operand']
  #allocation3 [shape = 'f32[72,256]{1,0:T(8,128)}', space=vmem, size = 0x12000, scoped, tag = 'scratch operand']
  %s0 = inlined_call_operand.hbm [shape: f32[2,16,256], index: 0, kind: input, shape index: {}]
  %s1 = inlined_call_operand.vmem [shape: f32[1,256], index: 1, kind: input, shape index: {}]
  %s2 = inlined_call_operand.vmem [shape: f32[1,256], index: 2, kind: input, shape index: {}]
  %s3 = inlined_call_operand.vmem [shape: f32[8,16], index: 3, kind: input, shape index: {}]
  %s4 = inlined_call_operand.vmem [shape: f32[8,1], index: 4, kind: input, shape index: {}]
  %s5 = inlined_call_operand.vmem [shape: f32[8,16], index: 5, kind: input, shape index: {}]
  %s6 = inlined_call_operand.vmem [shape: f32[8,1], index: 6, kind: input, shape index: {}]
  %s7 = inlined_call_operand.vmem [shape: f32[8,8], index: 7, kind: input, shape index: {}]
  %s8 = inlined_call_operand.vmem [shape: f32[8,1], index: 8, kind: input, shape index: {}]
  %s9 = inlined_call_operand.vmem [shape: f32[8,72], index: 9, kind: input, shape index: {}]
  %s10 = inlined_call_operand.vmem [shape: f32[8,1], index: 10, kind: input, shape index: {}]
  %s11 = inlined_call_operand.vmem [shape: f32[16,8], index: 11, kind: input, shape index: {}]
  %s12 = inlined_call_operand.vmem [shape: f32[16,8], index: 12, kind: input, shape index: {}]
  %s13 = inlined_call_operand.vmem [shape: f32[16,1], index: 13, kind: input, shape index: {}]
  %s14 = inlined_call_operand.hbm [shape: f32[2,16,256], index: 14, kind: output, shape index: {}]
  %s15 = sld [smem:[#allocation0]]
  $region93: #{tpu_custom_call.1} parent=0
    _
  %s17 = ssub.s32 1, %s15
  %s18 = scalar_select 0, %s17, %s15
  $region1: #{tpu_custom_call.1} parent=0
    #allocation4 [shape = 'u8[32768]{0}', space=vmem, size = 0x8000, scoped, tag = 'input window, operand 0']
    #allocation5 [shape = 's32[2]{0}', space=sflag, size = 0x8, scoped, tag = 'scoped memory for tpu_custom_call.1']
    #allocation6 [shape = 's32[2]{0}', space=sflag, size = 0x8, scoped, tag = 'scoped memory for tpu_custom_call.1']
    #allocation7 [shape = 'u8[32768]{0}', space=vmem, size = 0x8000, scoped, tag = 'output window, operand 0']
    %19 = vsyncpa [#allocation5], 0
    %s20 = scalar_lea.sflag [#allocation5], 1
    %21 = vsyncpa %s20, 0
    %22 = vsyncpa [#allocation6], 0
    %s23 = scalar_lea.sflag [#allocation6], 1
    %24 = vsyncpa %s23, 0
    loop: start=0, step=1, limit=4
    $region2: #{tpu_custom_call.1} parent=1 // loop_pre_header
      _
    $region3: #{tpu_custom_call.1} parent=1 // loop_header
      %s26 = sphi 0, %s30
      %p27 = scmp.ge.s32.totalorder %s26, 4
      %s36 = sphi 0, %s38
      %s39 = sphi 0, %s36
      %s40 = sphi 0, %s39
      %s56 = sphi 0, %s40
      %s60 = sphi 0, %s60
      %s62 = sphi 0, %s60
      %s63 = sphi 0, %s62
      %s77 = sphi 0, %s63
      %s81 = sphi 0, %s81
      %s83 = sphi 0, %s81
      %s84 = sphi 0, %s83
      %s98 = sphi 0, %s84
      %s102 = sphi 0, %s102
      %s104 = sphi 0, %s102
      %s105 = sphi 0, %s104
      %s119 = sphi 0, %s105
      %s123 = sphi 0, %s123
      %s125 = sphi 0, %s123
      %s126 = sphi 0, %s125
      %s140 = sphi 0, %s126
      %s144 = sphi 0, %s144
      %s146 = sphi 0, %s144
      %s147 = sphi 0, %s146
      %s161 = sphi 0, %s147
      %s165 = sphi 0, %s165
      %s167 = sphi 0, %s165
      %s168 = sphi 0, %s167
      %s182 = sphi 0, %s168
      %s186 = sphi 0, %s186
      %s188 = sphi 0, %s186
      %s189 = sphi 0, %s188
      %s203 = sphi 0, %s189
      %s207 = sphi 0, %s207
      %s209 = sphi 0, %s207
      %s210 = sphi 0, %s209
      %s224 = sphi 0, %s210
      %s228 = sphi 0, %s228
      %s230 = sphi 0, %s228
      %s231 = sphi 0, %s230
      %s245 = sphi 0, %s231
      %s249 = sphi 0, %s249
      %s251 = sphi 0, %s249
      %s252 = sphi 0, %s251
      %s266 = sphi 0, %s252
      %s270 = sphi 0, %s270
      %s272 = sphi 0, %s270
      %s273 = sphi 0, %s272
      %s287 = sphi 0, %s273
      %s291 = sphi 0, %s291
      %s293 = sphi 0, %s291
      %s294 = sphi 0, %s293
      %s308 = sphi 0, %s294
      %s312 = sphi 0, %s312
      %s314 = sphi 0, %s312
      %s315 = sphi 0, %s314
      %s329 = sphi 0, %s315
      %s335 = sphi 0, %s337
      %s338 = sphi 0, %s335
      %s339 = sphi 0, %s338
      %s355 = sphi 0, %s339
    $region4: #{tpu_custom_call.1} parent=1 // loop_header_branch
      %29 = sbr.rel (%p27) target = $region8
    $region5: #{tpu_custom_call.1} parent=1 // loop_body
      %s31 = ssub.s32 %s26, 1
      %s32 = ssub.s32 %s26, 2
      %s33 = sadd.s32 %s26, 1
      %s34 = ssub.s32 %s26, %s33
      %p35 = scmp.eq.s32.totalorder %s34, 0
      %s37 = sadd.s32 %s36, 1
      %s38 = scalar_select %p35, %s36, %s37
      %p41 = pneg %p35
      %p42 = scmp.eq.s32.totalorder %s26, 1
      %p43 = por %p41, %p42
      %p44 = scmp.ne.s32.totalorder %s36, %s39
      %p45 = scmp.eq.s32.totalorder %s26, 0
      %p46 = por %p44, %p45
      %p47 = scmp.ne.s32.totalorder %s36, %s39
      %p48 = scmp.eq.s32.totalorder %s31, 1
      %p49 = por %p47, %p48
      %p50 = scmp.ne.s32.totalorder %s39, %s40
      %p51 = scmp.eq.s32.totalorder %s31, 0
      %p52 = por %p50, %p51
      %p53 = scmp.ne.s32.totalorder %s39, %s40
      %p54 = scmp.eq.s32.totalorder %s32, 1
      %p55 = por %p53, %p54
      %p57 = scmp.ne.s32.totalorder %s40, %s56
      %p58 = scmp.eq.s32.totalorder %s32, 0
      %p59 = por %p57, %p58
      %s61 = sadd.s32 %s60, 1
      %p64 = scmp.eq.s32.totalorder %s26, 1
      %p65 = scmp.ne.s32.totalorder %s60, %s62
      %p66 = scmp.eq.s32.totalorder %s26, 0
      %p67 = por %p65, %p66
      %p68 = scmp.ne.s32.totalorder %s60, %s62
      %p69 = scmp.eq.s32.totalorder %s31, 1
      %p70 = por %p68, %p69
      %p71 = scmp.ne.s32.totalorder %s62, %s63
      %p72 = scmp.eq.s32.totalorder %s31, 0
      %p73 = por %p71, %p72
      %p74 = scmp.ne.s32.totalorder %s62, %s63
      %p75 = scmp.eq.s32.totalorder %s32, 1
      %p76 = por %p74, %p75
      %p78 = scmp.ne.s32.totalorder %s63, %s77
      %p79 = scmp.eq.s32.totalorder %s32, 0
      %p80 = por %p78, %p79
      %s82 = sadd.s32 %s81, 1
      %p85 = scmp.eq.s32.totalorder %s26, 1
      %p86 = scmp.ne.s32.totalorder %s81, %s83
      %p87 = scmp.eq.s32.totalorder %s26, 0
      %p88 = por %p86, %p87
      %p89 = scmp.ne.s32.totalorder %s81, %s83
      %p90 = scmp.eq.s32.totalorder %s31, 1
      %p91 = por %p89, %p90
      %p92 = scmp.ne.s32.totalorder %s83, %s84
      %p93 = scmp.eq.s32.totalorder %s31, 0
      %p94 = por %p92, %p93
      %p95 = scmp.ne.s32.totalorder %s83, %s84
      %p96 = scmp.eq.s32.totalorder %s32, 1
      %p97 = por %p95, %p96
      %p99 = scmp.ne.s32.totalorder %s84, %s98
      %p100 = scmp.eq.s32.totalorder %s32, 0
      %p101 = por %p99, %p100
      %s103 = sadd.s32 %s102, 1
      %p106 = scmp.eq.s32.totalorder %s26, 1
      %p107 = scmp.ne.s32.totalorder %s102, %s104
      %p108 = scmp.eq.s32.totalorder %s26, 0
      %p109 = por %p107, %p108
      %p110 = scmp.ne.s32.totalorder %s102, %s104
      %p111 = scmp.eq.s32.totalorder %s31, 1
      %p112 = por %p110, %p111
      %p113 = scmp.ne.s32.totalorder %s104, %s105
      %p114 = scmp.eq.s32.totalorder %s31, 0
      %p115 = por %p113, %p114
      %p116 = scmp.ne.s32.totalorder %s104, %s105
      %p117 = scmp.eq.s32.totalorder %s32, 1
      %p118 = por %p116, %p117
      %p120 = scmp.ne.s32.totalorder %s105, %s119
      %p121 = scmp.eq.s32.totalorder %s32, 0
      %p122 = por %p120, %p121
      %s124 = sadd.s32 %s123, 1
      %p127 = scmp.eq.s32.totalorder %s26, 1
      %p128 = scmp.ne.s32.totalorder %s123, %s125
      %p129 = scmp.eq.s32.totalorder %s26, 0
      %p130 = por %p128, %p129
      %p131 = scmp.ne.s32.totalorder %s123, %s125
      %p132 = scmp.eq.s32.totalorder %s31, 1
      %p133 = por %p131, %p132
      %p134 = scmp.ne.s32.totalorder %s125, %s126
      %p135 = scmp.eq.s32.totalorder %s31, 0
      %p136 = por %p134, %p135
      %p137 = scmp.ne.s32.totalorder %s125, %s126
      %p138 = scmp.eq.s32.totalorder %s32, 1
      %p139 = por %p137, %p138
      %p141 = scmp.ne.s32.totalorder %s126, %s140
      %p142 = scmp.eq.s32.totalorder %s32, 0
      %p143 = por %p141, %p142
      %s145 = sadd.s32 %s144, 1
      %p148 = scmp.eq.s32.totalorder %s26, 1
      %p149 = scmp.ne.s32.totalorder %s144, %s146
      %p150 = scmp.eq.s32.totalorder %s26, 0
      %p151 = por %p149, %p150
      %p152 = scmp.ne.s32.totalorder %s144, %s146
      %p153 = scmp.eq.s32.totalorder %s31, 1
      %p154 = por %p152, %p153
      %p155 = scmp.ne.s32.totalorder %s146, %s147
      %p156 = scmp.eq.s32.totalorder %s31, 0
      %p157 = por %p155, %p156
      %p158 = scmp.ne.s32.totalorder %s146, %s147
      %p159 = scmp.eq.s32.totalorder %s32, 1
      %p160 = por %p158, %p159
      %p162 = scmp.ne.s32.totalorder %s147, %s161
      %p163 = scmp.eq.s32.totalorder %s32, 0
      %p164 = por %p162, %p163
      %s166 = sadd.s32 %s165, 1
      %p169 = scmp.eq.s32.totalorder %s26, 1
      %p170 = scmp.ne.s32.totalorder %s165, %s167
      %p171 = scmp.eq.s32.totalorder %s26, 0
      %p172 = por %p170, %p171
      %p173 = scmp.ne.s32.totalorder %s165, %s167
      %p174 = scmp.eq.s32.totalorder %s31, 1
      %p175 = por %p173, %p174
      %p176 = scmp.ne.s32.totalorder %s167, %s168
      %p177 = scmp.eq.s32.totalorder %s31, 0
      %p178 = por %p176, %p177
      %p179 = scmp.ne.s32.totalorder %s167, %s168
      %p180 = scmp.eq.s32.totalorder %s32, 1
      %p181 = por %p179, %p180
      %p183 = scmp.ne.s32.totalorder %s168, %s182
      %p184 = scmp.eq.s32.totalorder %s32, 0
      %p185 = por %p183, %p184
      %s187 = sadd.s32 %s186, 1
      %p190 = scmp.eq.s32.totalorder %s26, 1
      %p191 = scmp.ne.s32.totalorder %s186, %s188
      %p192 = scmp.eq.s32.totalorder %s26, 0
      %p193 = por %p191, %p192
      %p194 = scmp.ne.s32.totalorder %s186, %s188
      %p195 = scmp.eq.s32.totalorder %s31, 1
      %p196 = por %p194, %p195
      %p197 = scmp.ne.s32.totalorder %s188, %s189
      %p198 = scmp.eq.s32.totalorder %s31, 0
      %p199 = por %p197, %p198
      %p200 = scmp.ne.s32.totalorder %s188, %s189
      %p201 = scmp.eq.s32.totalorder %s32, 1
      %p202 = por %p200, %p201
      %p204 = scmp.ne.s32.totalorder %s189, %s203
      %p205 = scmp.eq.s32.totalorder %s32, 0
      %p206 = por %p204, %p205
      %s208 = sadd.s32 %s207, 1
      %p211 = scmp.eq.s32.totalorder %s26, 1
      %p212 = scmp.ne.s32.totalorder %s207, %s209
      %p213 = scmp.eq.s32.totalorder %s26, 0
      %p214 = por %p212, %p213
      %p215 = scmp.ne.s32.totalorder %s207, %s209
      %p216 = scmp.eq.s32.totalorder %s31, 1
      %p217 = por %p215, %p216
      %p218 = scmp.ne.s32.totalorder %s209, %s210
      %p219 = scmp.eq.s32.totalorder %s31, 0
      %p220 = por %p218, %p219
      %p221 = scmp.ne.s32.totalorder %s209, %s210
      %p222 = scmp.eq.s32.totalorder %s32, 1
      %p223 = por %p221, %p222
      %p225 = scmp.ne.s32.totalorder %s210, %s224
      %p226 = scmp.eq.s32.totalorder %s32, 0
      %p227 = por %p225, %p226
      %s229 = sadd.s32 %s228, 1
      %p232 = scmp.eq.s32.totalorder %s26, 1
      %p233 = scmp.ne.s32.totalorder %s228, %s230
      %p234 = scmp.eq.s32.totalorder %s26, 0
      %p235 = por %p233, %p234
      %p236 = scmp.ne.s32.totalorder %s228, %s230
      %p237 = scmp.eq.s32.totalorder %s31, 1
      %p238 = por %p236, %p237
      %p239 = scmp.ne.s32.totalorder %s230, %s231
      %p240 = scmp.eq.s32.totalorder %s31, 0
      %p241 = por %p239, %p240
      %p242 = scmp.ne.s32.totalorder %s230, %s231
      %p243 = scmp.eq.s32.totalorder %s32, 1
      %p244 = por %p242, %p243
      %p246 = scmp.ne.s32.totalorder %s231, %s245
      %p247 = scmp.eq.s32.totalorder %s32, 0
      %p248 = por %p246, %p247
      %s250 = sadd.s32 %s249, 1
      %p253 = scmp.eq.s32.totalorder %s26, 1
      %p254 = scmp.ne.s32.totalorder %s249, %s251
      %p255 = scmp.eq.s32.totalorder %s26, 0
      %p256 = por %p254, %p255
      %p257 = scmp.ne.s32.totalorder %s249, %s251
      %p258 = scmp.eq.s32.totalorder %s31, 1
      %p259 = por %p257, %p258
      %p260 = scmp.ne.s32.totalorder %s251, %s252
      %p261 = scmp.eq.s32.totalorder %s31, 0
      %p262 = por %p260, %p261
      %p263 = scmp.ne.s32.totalorder %s251, %s252
      %p264 = scmp.eq.s32.totalorder %s32, 1
      %p265 = por %p263, %p264
      %p267 = scmp.ne.s32.totalorder %s252, %s266
      %p268 = scmp.eq.s32.totalorder %s32, 0
      %p269 = por %p267, %p268
      %s271 = sadd.s32 %s270, 1
      %p274 = scmp.eq.s32.totalorder %s26, 1
      %p275 = scmp.ne.s32.totalorder %s270, %s272
      %p276 = scmp.eq.s32.totalorder %s26, 0
      %p277 = por %p275, %p276
      %p278 = scmp.ne.s32.totalorder %s270, %s272
      %p279 = scmp.eq.s32.totalorder %s31, 1
      %p280 = por %p278, %p279
      %p281 = scmp.ne.s32.totalorder %s272, %s273
      %p282 = scmp.eq.s32.totalorder %s31, 0
      %p283 = por %p281, %p282
      %p284 = scmp.ne.s32.totalorder %s272, %s273
      %p285 = scmp.eq.s32.totalorder %s32, 1
      %p286 = por %p284, %p285
      %p288 = scmp.ne.s32.totalorder %s273, %s287
      %p289 = scmp.eq.s32.totalorder %s32, 0
      %p290 = por %p288, %p289
      %s292 = sadd.s32 %s291, 1
      %p295 = scmp.eq.s32.totalorder %s26, 1
      %p296 = scmp.ne.s32.totalorder %s291, %s293
      %p297 = scmp.eq.s32.totalorder %s26, 0
      %p298 = por %p296, %p297
      %p299 = scmp.ne.s32.totalorder %s291, %s293
      %p300 = scmp.eq.s32.totalorder %s31, 1
      %p301 = por %p299, %p300
      %p302 = scmp.ne.s32.totalorder %s293, %s294
      %p303 = scmp.eq.s32.totalorder %s31, 0
      %p304 = por %p302, %p303
      %p305 = scmp.ne.s32.totalorder %s293, %s294
      %p306 = scmp.eq.s32.totalorder %s32, 1
      %p307 = por %p305, %p306
      %p309 = scmp.ne.s32.totalorder %s294, %s308
      %p310 = scmp.eq.s32.totalorder %s32, 0
      %p311 = por %p309, %p310
      %s313 = sadd.s32 %s312, 1
      %p316 = scmp.eq.s32.totalorder %s26, 1
      %p317 = scmp.ne.s32.totalorder %s312, %s314
      %p318 = scmp.eq.s32.totalorder %s26, 0
      %p319 = por %p317, %p318
      %p320 = scmp.ne.s32.totalorder %s312, %s314
      %p321 = scmp.eq.s32.totalorder %s31, 1
      %p322 = por %p320, %p321
      %p323 = scmp.ne.s32.totalorder %s314, %s315
      %p324 = scmp.eq.s32.totalorder %s31, 0
      %p325 = por %p323, %p324
      %p326 = scmp.ne.s32.totalorder %s314, %s315
      %p327 = scmp.eq.s32.totalorder %s32, 1
      %p328 = por %p326, %p327
      %p330 = scmp.ne.s32.totalorder %s315, %s329
      %p331 = scmp.eq.s32.totalorder %s32, 0
      %p332 = por %p330, %p331
      %s333 = ssub.s32 %s26, %s33
      %p334 = scmp.eq.s32.totalorder %s333, 0
      %s336 = sadd.s32 %s335, 1
      %s337 = scalar_select %p334, %s335, %s336
      %p340 = pneg %p334
      %p341 = scmp.eq.s32.totalorder %s26, 1
      %p342 = por %p340, %p341
      %p343 = scmp.ne.s32.totalorder %s335, %s338
      %p344 = scmp.eq.s32.totalorder %s26, 0
      %p345 = por %p343, %p344
      %p346 = scmp.ne.s32.totalorder %s335, %s338
      %p347 = scmp.eq.s32.totalorder %s31, 1
      %p348 = por %p346, %p347
      %p349 = scmp.ne.s32.totalorder %s338, %s339
      %p350 = scmp.eq.s32.totalorder %s31, 0
      %p351 = por %p349, %p350
      %p352 = scmp.ne.s32.totalorder %s338, %s339
      %p353 = scmp.eq.s32.totalorder %s32, 1
      %p354 = por %p352, %p353
      %p356 = scmp.ne.s32.totalorder %s339, %s355
      %p357 = scmp.eq.s32.totalorder %s32, 0
      %p358 = por %p356, %p357
      %p359 = scmp.le.s32.totalorder 1, %s26
      %p360 = scmp.lt.s32.totalorder %s26, 3
      %p361 = pnand %p359, %p360
      %p362 = pneg %p361
      // Predicated region
      $region9: #{tpu_custom_call.1} parent=5 // pred_check
        _
      $region10: #{tpu_custom_call.1} parent=5 // pred_check_branch
        %364 = sbr.rel (%p361) target = $region12
      $region11: #{tpu_custom_call.1} parent=5 // pred_region
        %s365 = ssub.s32 %s26, 1
        // Predicated region
        $region13: #{tpu_custom_call.1} parent=11 // pred_check
          %p366 = pneg %p73
        $region14: #{tpu_custom_call.1} parent=11 // pred_check_branch
          %368 = sbr.rel (%p366) target = $region16
        $region15: #{tpu_custom_call.1} parent=11 // pred_region
          _
        $region16: #{tpu_custom_call.1} parent=11 // pred_fallthru
          _
        // Predicated region
        $region17: #{tpu_custom_call.1} parent=11 // pred_check
          %p369 = pneg %p94
        $region18: #{tpu_custom_call.1} parent=11 // pred_check_branch
          %371 = sbr.rel (%p369) target = $region20
        $region19: #{tpu_custom_call.1} parent=11 // pred_region
          _
        $region20: #{tpu_custom_call.1} parent=11 // pred_fallthru
          _
        // Predicated region
        $region21: #{tpu_custom_call.1} parent=11 // pred_check
          %p372 = pneg %p115
        $region22: #{tpu_custom_call.1} parent=11 // pred_check_branch
          %374 = sbr.rel (%p372) target = $region24
        $region23: #{tpu_custom_call.1} parent=11 // pred_region
          _
        $region24: #{tpu_custom_call.1} parent=11 // pred_fallthru
          _
        // Predicated region
        $region25: #{tpu_custom_call.1} parent=11 // pred_check
          %p375 = pneg %p136
        $region26: #{tpu_custom_call.1} parent=11 // pred_check_branch
          %377 = sbr.rel (%p375) target = $region28
        $region27: #{tpu_custom_call.1} parent=11 // pred_region
          _
        $region28: #{tpu_custom_call.1} parent=11 // pred_fallthru
          _
        // Predicated region
        $region29: #{tpu_custom_call.1} parent=11 // pred_check
          %p378 = pneg %p157
        $region30: #{tpu_custom_call.1} parent=11 // pred_check_branch
          %380 = sbr.rel (%p378) target = $region32
        $region31: #{tpu_custom_call.1} parent=11 // pred_region
          _
        $region32: #{tpu_custom_call.1} parent=11 // pred_fallthru
          _
        // Predicated region
        $region33: #{tpu_custom_call.1} parent=11 // pred_check
          %p381 = pneg %p178
        $region34: #{tpu_custom_call.1} parent=11 // pred_check_branch
          %383 = sbr.rel (%p381) target = $region36
        $region35: #{tpu_custom_call.1} parent=11 // pred_region
          _
        $region36: #{tpu_custom_call.1} parent=11 // pred_fallthru
          _
        // Predicated region
        $region37: #{tpu_custom_call.1} parent=11 // pred_check
          %p384 = pneg %p199
        $region38: #{tpu_custom_call.1} parent=11 // pred_check_branch
          %386 = sbr.rel (%p384) target = $region40
        $region39: #{tpu_custom_call.1} parent=11 // pred_region
          _
        $region40: #{tpu_custom_call.1} parent=11 // pred_fallthru
          _
        // Predicated region
        $region41: #{tpu_custom_call.1} parent=11 // pred_check
          %p387 = pneg %p220
        $region42: #{tpu_custom_call.1} parent=11 // pred_check_branch
          %389 = sbr.rel (%p387) target = $region44
        $region43: #{tpu_custom_call.1} parent=11 // pred_region
          _
        $region44: #{tpu_custom_call.1} parent=11 // pred_fallthru
          _
        // Predicated region
        $region45: #{tpu_custom_call.1} parent=11 // pred_check
          %p390 = pneg %p241
        $region46: #{tpu_custom_call.1} parent=11 // pred_check_branch
          %392 = sbr.rel (%p390) target = $region48
        $region47: #{tpu_custom_call.1} parent=11 // pred_region
          _
        $region48: #{tpu_custom_call.1} parent=11 // pred_fallthru
          _
        // Predicated region
        $region49: #{tpu_custom_call.1} parent=11 // pred_check
          %p393 = pneg %p262
        $region50: #{tpu_custom_call.1} parent=11 // pred_check_branch
          %395 = sbr.rel (%p393) target = $region52
        $region51: #{tpu_custom_call.1} parent=11 // pred_region
          _
        $region52: #{tpu_custom_call.1} parent=11 // pred_fallthru
          _
        // Predicated region
        $region53: #{tpu_custom_call.1} parent=11 // pred_check
          %p396 = pneg %p283
        $region54: #{tpu_custom_call.1} parent=11 // pred_check_branch
          %398 = sbr.rel (%p396) target = $region56
        $region55: #{tpu_custom_call.1} parent=11 // pred_region
          _
        $region56: #{tpu_custom_call.1} parent=11 // pred_fallthru
          _
        // Predicated region
        $region57: #{tpu_custom_call.1} parent=11 // pred_check
          %p399 = pneg %p304
        $region58: #{tpu_custom_call.1} parent=11 // pred_check_branch
          %401 = sbr.rel (%p399) target = $region60
        $region59: #{tpu_custom_call.1} parent=11 // pred_region
          _
        $region60: #{tpu_custom_call.1} parent=11 // pred_fallthru
          _
        // Predicated region
        $region61: #{tpu_custom_call.1} parent=11 // pred_check
          %p402 = pneg %p325
        $region62: #{tpu_custom_call.1} parent=11 // pred_check_branch
          %404 = sbr.rel (%p402) target = $region64
        $region63: #{tpu_custom_call.1} parent=11 // pred_region
          _
        $region64: #{tpu_custom_call.1} parent=11 // pred_fallthru
          _
      $region12: #{tpu_custom_call.1} parent=5 // pred_fallthru
        _
      %p405 = scmp.lt.s32.totalorder %s26, 2
      // Predicated region
      $region65: #{tpu_custom_call.1} parent=5 // pred_check
        %p406 = pneg %p405
      $region66: #{tpu_custom_call.1} parent=5 // pred_check_branch
        %408 = sbr.rel (%p406) target = $region68
      $region67: #{tpu_custom_call.1} parent=5 // pred_region
        // Predicated region
        $region69: #{tpu_custom_call.1} parent=67 // pred_check
          %p409 = pneg %p46
        $region70: #{tpu_custom_call.1} parent=67 // pred_check_branch
          %411 = sbr.rel (%p409) target = $region72
        $region71: #{tpu_custom_call.1} parent=67 // pred_region
          %s412 = sand.u32 %s36, 1
          %s413 = scalar_lea.sflag [#allocation5], %s412
          %s414 = sand.u32 %s36, 1
          %s415 = smul.addr %s414, 32
          %s416 = scalar_lea.vmem [#allocation4], %s415
          %418 = vsyncadd %s413, 0
          %s419 = smul.addr %s26, 4
          %s420 = smul.addr %s419, 8
          %s421 = scalar_lea.hbm %s0, %s420
          %s422 = sshll.u32 %s421, 4
          %s423 = int_to_ptr.hbm [resolvable:$true] %s422
          %s424 = sshll.u32 %s416, 4
          %s425 = int_to_ptr.vmem [resolvable:$true] %s424
          %430 = dma.hbm_to_vmem [thread:$0]  %s423, 512, %s425, %s413, 256, 256, 16
        $region72: #{tpu_custom_call.1} parent=67 // pred_fallthru
          _
      $region68: #{tpu_custom_call.1} parent=5 // pred_fallthru
        _
      %p431 = scmp.le.s32.totalorder 1, %s26
      %p432 = scmp.lt.s32.totalorder %s26, 3
      %p433 = pnand %p431, %p432
      %p434 = pneg %p433
      // Predicated region
      $region73: #{tpu_custom_call.1} parent=5 // pred_check
        _
      $region74: #{tpu_custom_call.1} parent=5 // pred_check_branch
        %436 = sbr.rel (%p433) target = $region76
      $region75: #{tpu_custom_call.1} parent=5 // pred_region
        %s437 = ssub.s32 %s26, 1
        %s438 = sand.u32 %s39, 1
        %s439 = scalar_lea.sflag [#allocation5], %s438
        %s440 = sand.u32 %s39, 1
        %s441 = smul.addr %s440, 32
        %s442 = scalar_lea.vmem [#allocation4], %s441
        // Predicated region
        $region77: #{tpu_custom_call.1} parent=75 // pred_check
          %p443 = pneg %p52
        $region78: #{tpu_custom_call.1} parent=75 // pred_check_branch
          %445 = sbr.rel (%p443) target = $region80
        $region79: #{tpu_custom_call.1} parent=75 // pred_region
          %447 = dma.done %s439, 512
        $region80: #{tpu_custom_call.1} parent=75 // pred_fallthru
          _
        %s448 = sand.u32 %s39, 1
        %s449 = scalar_lea.sflag [#allocation5], %s448
        %s450 = sand.u32 %s39, 1
        %s451 = smul.addr %s450, 32
        %s452 = scalar_lea.vmem [#allocation4], %s451
        %p453 = pneg %p52
        %p454 = pneg %p49
        %p455 = pneg %p73
        %p456 = pneg %p70
        %p457 = pneg %p94
        %p458 = pneg %p91
        %p459 = pneg %p115
        %p460 = pneg %p112
        %p461 = pneg %p136
        %p462 = pneg %p133
        %p463 = pneg %p157
        %p464 = pneg %p154
        %p465 = pneg %p178
        %p466 = pneg %p175
        %p467 = pneg %p199
        %p468 = pneg %p196
        %p469 = pneg %p220
        %p470 = pneg %p217
        %p471 = pneg %p241
        %p472 = pneg %p238
        %p473 = pneg %p262
        %p474 = pneg %p259
        %p475 = pneg %p283
        %p476 = pneg %p280
        %p477 = pneg %p304
        %p478 = pneg %p301
        %p479 = pneg %p325
        %p480 = pneg %p322
        %p481 = pneg %p351
        %p482 = pneg %p348
        %s483 = sand.u32 %s338, 1
        %s484 = scalar_lea.sflag [#allocation6], %s483
        %s485 = sand.u32 %s338, 1
        %s486 = smul.addr %s485, 32
        %s487 = scalar_lea.vmem [#allocation7], %s486
        %v488 = vld [vmem:[%s442] sm:$0xff]
        %v489 = vld [vmem:[%s442 + $0x8] sm:$0xff]
        %v490 = vld [vmem:[%s442 + $0x10] sm:$0xff]
        %v491 = vld [vmem:[%s442 + $0x18] sm:$0xff]
        %v492 = vld [vmem:[%s3] sm:$0xff]
        %v493 = vld [vmem:[%s4] sm:$0xff]
        %495 = vset.pattern.permute.xlu0 0
        %496 = vperm.xlu0 %495, %v493
        %v497 = vpop.permute.xlu0 %496
        %vm499 = vcmask 130048
        %v501 = vsel %vm499, %v492, 0
        %503 = vmatpush.msra.mxu0 0.0
        %504 = vmatpush.msra.mxu0 0.0
        %505 = vmatpush.msra.mxu0 0.0
        %506 = vmatpush.msra.mxu0 0.0
        %507 = vmatpush.msra.mxu0 0.0
        %508 = vmatpush.msra.mxu0 0.0
        %509 = vmatpush.msra.mxu0 0.0
        %510 = vmatpush.msra.mxu0 0.0
        %511 = vmatpush.msra.mxu0 0.0
        %512 = vmatpush.msra.mxu0 0.0
        %513 = vmatpush.msra.mxu0 0.0
        %514 = vmatpush.msra.mxu0 0.0
        %515 = vmatpush.msra.mxu0 0.0
        %516 = vmatpush.msra.mxu0 0.0
        %517 = vmatpush.msra.mxu0 %v490
        %518 = vmatpush.msra.mxu0 %v488
        %519 = vmatmul.f32.gmra.mxu0 %v501
        %v520 = vpop.f32.mrf.mxu0
        %v521 = vadd.f32 %v497, %v520
        %522 = vdwg.mxu0
        %523 = vmatpush.msra.mxu0 0.0
        %524 = vmatpush.msra.mxu0 0.0
        %525 = vmatpush.msra.mxu0 0.0
        %526 = vmatpush.msra.mxu0 0.0
        %527 = vmatpush.msra.mxu0 0.0
        %528 = vmatpush.msra.mxu0 0.0
        %529 = vmatpush.msra.mxu0 0.0
        %530 = vmatpush.msra.mxu0 0.0
        %531 = vmatpush.msra.mxu0 0.0
        %532 = vmatpush.msra.mxu0 0.0
        %533 = vmatpush.msra.mxu0 0.0
        %534 = vmatpush.msra.mxu0 0.0
        %535 = vmatpush.msra.mxu0 0.0
        %536 = vmatpush.msra.mxu0 0.0
        %537 = vmatpush.msra.mxu0 %v491
        %538 = vmatpush.msra.mxu0 %v489
        %539 = vmatmul.f32.gmra.mxu0 %v501
        %v540 = vpop.f32.mrf.mxu0
        %v541 = vadd.f32 %v497, %v540
        %542 = vdwg.mxu0
        %vm543 = vcmp.ge.f32.partialorder %v521, 0.0
        %vm544 = vcmp.ge.f32.partialorder %v541, 0.0
        %v545 = vmul.f32 %v521, 0.01
        %v546 = vmul.f32 %v541, 0.01
        %v547 = vsel %vm543, %v521, %v545
        %v548 = vsel %vm544, %v541, %v546
        %v549 = vld [vmem:[%s5] sm:$0xff]
        %v550 = vld [vmem:[%s6] sm:$0xff]
        %552 = vset.pattern.permute.xlu0 0
        %553 = vperm.xlu0 %552, %v550
        %v554 = vpop.permute.xlu0 %553
        %v557 = vsel %vm499, %v549, 0
        %559 = vmatpush.msra.mxu0 0.0
        %560 = vmatpush.msra.mxu0 0.0
        %561 = vmatpush.msra.mxu0 0.0
        %562 = vmatpush.msra.mxu0 0.0
        %563 = vmatpush.msra.mxu0 0.0
        %564 = vmatpush.msra.mxu0 0.0
        %565 = vmatpush.msra.mxu0 0.0
        %566 = vmatpush.msra.mxu0 0.0
        %567 = vmatpush.msra.mxu0 0.0
        %568 = vmatpush.msra.mxu0 0.0
        %569 = vmatpush.msra.mxu0 0.0
        %570 = vmatpush.msra.mxu0 0.0
        %571 = vmatpush.msra.mxu0 0.0
        %572 = vmatpush.msra.mxu0 0.0
        %573 = vmatpush.msra.mxu0 %v490
        %574 = vmatpush.msra.mxu0 %v488
        %575 = vmatmul.f32.gmra.mxu0 %v557
        %v576 = vpop.f32.mrf.mxu0
        %v577 = vadd.f32 %v554, %v576
        %578 = vdwg.mxu0
        %579 = vmatpush.msra.mxu0 0.0
        %580 = vmatpush.msra.mxu0 0.0
        %581 = vmatpush.msra.mxu0 0.0
        %582 = vmatpush.msra.mxu0 0.0
        %583 = vmatpush.msra.mxu0 0.0
        %584 = vmatpush.msra.mxu0 0.0
        %585 = vmatpush.msra.mxu0 0.0
        %586 = vmatpush.msra.mxu0 0.0
        %587 = vmatpush.msra.mxu0 0.0
        %588 = vmatpush.msra.mxu0 0.0
        %589 = vmatpush.msra.mxu0 0.0
        %590 = vmatpush.msra.mxu0 0.0
        %591 = vmatpush.msra.mxu0 0.0
        %592 = vmatpush.msra.mxu0 0.0
        %593 = vmatpush.msra.mxu0 %v491
        %594 = vmatpush.msra.mxu0 %v489
        %595 = vmatmul.f32.gmra.mxu0 %v557
        %v596 = vpop.f32.mrf.mxu0
        %v597 = vadd.f32 %v554, %v596
        %598 = vdwg.mxu0
        %vm599 = vcmp.ge.f32.partialorder %v577, 0.0
        %vm600 = vcmp.ge.f32.partialorder %v597, 0.0
        %v601 = vmul.f32 %v577, 0.01
        %v602 = vmul.f32 %v597, 0.01
        %v603 = vsel %vm599, %v577, %v601
        %v604 = vsel %vm600, %v597, %v602
        %v605 = vld [vmem:[%s7] sm:$0xff]
        %v606 = vld [vmem:[%s8] sm:$0xff]
        %608 = vset.pattern.permute.xlu0 0
        %609 = vperm.xlu0 %608, %v606
        %v610 = vpop.permute.xlu0 %609
        %vm612 = vcmask 64512
        %v614 = vsel %vm612, %v605, 0
        %616 = vmatpush.msra.mxu0 0.0
        %617 = vmatpush.msra.mxu0 0.0
        %618 = vmatpush.msra.mxu0 0.0
        %619 = vmatpush.msra.mxu0 0.0
        %620 = vmatpush.msra.mxu0 0.0
        %621 = vmatpush.msra.mxu0 0.0
        %622 = vmatpush.msra.mxu0 0.0
        %623 = vmatpush.msra.mxu0 0.0
        %624 = vmatpush.msra.mxu0 0.0
        %625 = vmatpush.msra.mxu0 0.0
        %626 = vmatpush.msra.mxu0 0.0
        %627 = vmatpush.msra.mxu0 0.0
        %628 = vmatpush.msra.mxu0 0.0
        %629 = vmatpush.msra.mxu0 0.0
        %630 = vmatpush.msra.mxu0 0.0
        %631 = vmatpush.msra.mxu0 %v547
        %632 = vmatmul.f32.gmra.mxu0 %v614
        %v633 = vpop.f32.mrf.mxu0
        %v634 = vadd.f32 %v610, %v633
        %635 = vdwg.mxu0
        %636 = vmatpush.msra.mxu0 0.0
        %637 = vmatpush.msra.mxu0 0.0
        %638 = vmatpush.msra.mxu0 0.0
        %639 = vmatpush.msra.mxu0 0.0
        %640 = vmatpush.msra.mxu0 0.0
        %641 = vmatpush.msra.mxu0 0.0
        %642 = vmatpush.msra.mxu0 0.0
        %643 = vmatpush.msra.mxu0 0.0
        %644 = vmatpush.msra.mxu0 0.0
        %645 = vmatpush.msra.mxu0 0.0
        %646 = vmatpush.msra.mxu0 0.0
        %647 = vmatpush.msra.mxu0 0.0
        %648 = vmatpush.msra.mxu0 0.0
        %649 = vmatpush.msra.mxu0 0.0
        %650 = vmatpush.msra.mxu0 0.0
        %651 = vmatpush.msra.mxu0 %v548
        %652 = vmatmul.f32.gmra.mxu0 %v614
        %v653 = vpop.f32.mrf.mxu0
        %v654 = vadd.f32 %v610, %v653
        %655 = vdwg.mxu0
        %vm656 = vcmp.ge.f32.partialorder %v634, 0.0
        %vm657 = vcmp.ge.f32.partialorder %v654, 0.0
        %v658 = vmul.f32 %v634, 0.01
        %v659 = vmul.f32 %v654, 0.01
        %v660 = vsel %vm656, %v634, %v658
        %v661 = vsel %vm657, %v654, %v659
        %662 = vst [vmem:[#allocation2] sm:$0xff] 0.0
        %vm663 = vcmask 138240
        %664 = vst.msk [vmem:[#allocation2 + $0x18] sm:$0xff] %vm663, 0.0
        %665 = vst [vmem:[#allocation2 + $0x8] sm:$0xff] %v660
        %666 = vst [vmem:[#allocation2 + $0x10] sm:$0xff] %v661
        %v667 = vld [vmem:[%s1] sm:$0x3]
        %v668 = vld [vmem:[%s2] sm:$0x3]
        %v669 = vld [vmem:[#allocation2] sm:$0xff]
        %v670 = vld [vmem:[#allocation2 + $0x8] sm:$0xff]
        %v671 = vld [vmem:[#allocation2 + $0x10] sm:$0xff]
        %v673 = vperm.slane %v667, 0
        %v674 = vperm.slane %v667, 1
        %675 = vrot.lane.b32.xlu0 %v673, 111
        %v676 = vpop.permute.xlu0 %675
        %677 = vrot.lane.b32.xlu0 %v674, 111
        %v678 = vpop.permute.xlu0 %677
        %vm679 = vcmask 908288
        %v680 = vsel %vm679, %v676, %v678
        %v684 = vmul.f32 %v669, %v676
        %v685 = vmul.f32 %v670, %v680
        %v686 = vmul.f32 %v671, %v678
        %690 = vrot.lane.b32.xlu0 %v684, 17
        %v691 = vpop.permute.xlu0 %690
        %692 = vrot.lane.b32.xlu0 %v685, 17
        %v693 = vpop.permute.xlu0 %692
        %694 = vrot.lane.b32.xlu0 %v686, 17
        %v695 = vpop.permute.xlu0 %694
        %v696 = vsel %vm663, %v691, %v693
        %v697 = vsel %vm663, %v693, %v695
        %700 = vst [vmem:[#allocation3] sm:$0xff] %v696
        %701 = vst [vmem:[#allocation3 + $0x8] sm:$0xff] %v697
        %v702 = vld [vmem:[#allocation2] sm:$0xff]
        %v703 = vld [vmem:[#allocation2 + $0x8] sm:$0xff]
        %v704 = vld [vmem:[#allocation2 + $0x10] sm:$0xff]
        %708 = vrot.lane.b32.xlu0 %v702, 16
        %v709 = vpop.permute.xlu0 %708
        %710 = vrot.lane.b32.xlu0 %v703, 16
        %v711 = vpop.permute.xlu0 %710
        %712 = vrot.lane.b32.xlu0 %v704, 16
        %v713 = vpop.permute.xlu0 %712
        %v714 = vsel %vm499, %v709, %v711
        %v715 = vsel %vm499, %v711, %v713
        %718 = vst [vmem:[#allocation3 + $0x10] sm:$0xff] %v714
        %719 = vst [vmem:[#allocation3 + $0x18] sm:$0xff] %v715
        %v720 = vld [vmem:[#allocation2] sm:$0xff]
        %v721 = vld [vmem:[#allocation2 + $0x8] sm:$0xff]
        %v722 = vld [vmem:[#allocation2 + $0x10] sm:$0xff]
        %v724 = vperm.slane %v668, 0
        %v725 = vperm.slane %v668, 1
        %726 = vrot.lane.b32.xlu0 %v724, 113
        %v727 = vpop.permute.xlu0 %726
        %728 = vrot.lane.b32.xlu0 %v725, 113
        %v729 = vpop.permute.xlu0 %728
        %vm730 = vcmask 924672
        %v731 = vsel %vm730, %v727, %v729
        %v735 = vmul.f32 %v720, %v727
        %v736 = vmul.f32 %v721, %v731
        %v737 = vmul.f32 %v722, %v729
        %741 = vrot.lane.b32.xlu0 %v735, 15
        %v742 = vpop.permute.xlu0 %741
        %743 = vrot.lane.b32.xlu0 %v736, 15
        %v744 = vpop.permute.xlu0 %743
        %745 = vrot.lane.b32.xlu0 %v737, 15
        %v746 = vpop.permute.xlu0 %745
        %vm747 = vcmask 121856
        %v748 = vsel %vm747, %v742, %v744
        %v749 = vsel %vm747, %v744, %v746
        %752 = vst [vmem:[#allocation3 + $0x20] sm:$0xff] %v748
        %753 = vst [vmem:[#allocation3 + $0x28] sm:$0xff] %v749
        %v754 = vld [vmem:[#allocation2] sm:$0xff]
        %v755 = vld [vmem:[#allocation2 + $0x8] sm:$0xff]
        %v756 = vld [vmem:[#allocation2 + $0x10] sm:$0xff]
        %757 = vrot.lane.b32.xlu0 %v673, 127
        %v758 = vpop.permute.xlu0 %757
        %759 = vrot.lane.b32.xlu0 %v674, 127
        %v760 = vpop.permute.xlu0 %759
        %vm761 = vcmask 1039360
        %v762 = vsel %vm761, %v758, %v760
        %v766 = vmul.f32 %v754, %v758
        %v767 = vmul.f32 %v755, %v762
        %v768 = vmul.f32 %v756, %v760
        %772 = vrot.lane.b32.xlu0 %v766, 1
        %v773 = vpop.permute.xlu0 %772
        %774 = vrot.lane.b32.xlu0 %v767, 1
        %v775 = vpop.permute.xlu0 %774
        %776 = vrot.lane.b32.xlu0 %v768, 1
        %v777 = vpop.permute.xlu0 %776
        %vm778 = vcmask 7168
        %v779 = vsel %vm778, %v773, %v775
        %v780 = vsel %vm778, %v775, %v777
        %783 = vst [vmem:[#allocation3 + $0x30] sm:$0xff] %v779
        %784 = vst [vmem:[#allocation3 + $0x38] sm:$0xff] %v780
        %v785 = vld [vmem:[#allocation2 + $0x8] sm:$0xff]
        %v786 = vld [vmem:[#allocation2 + $0x10] sm:$0xff]
        %787 = vst [vmem:[#allocation3 + $0x40] sm:$0xff] %v785
        %788 = vst [vmem:[#allocation3 + $0x48] sm:$0xff] %v786
        %v789 = vld [vmem:[#allocation2 + $0x8] sm:$0xff]
        %v790 = vld [vmem:[#allocation2 + $0x10] sm:$0xff]
        %v791 = vld [vmem:[#allocation2 + $0x18] sm:$0xff]
        %792 = vrot.lane.b32.xlu0 %v724, 1
        %v793 = vpop.permute.xlu0 %792
        %794 = vrot.lane.b32.xlu0 %v725, 1
        %v795 = vpop.permute.xlu0 %794
        %v796 = vsel %vm778, %v793, %v795
        %v800 = vmul.f32 %v789, %v793
        %v801 = vmul.f32 %v790, %v796
        %v802 = vmul.f32 %v791, %v795
        %806 = vrot.lane.b32.xlu0 %v800, 127
        %v807 = vpop.permute.xlu0 %806
        %808 = vrot.lane.b32.xlu0 %v801, 127
        %v809 = vpop.permute.xlu0 %808
        %810 = vrot.lane.b32.xlu0 %v802, 127
        %v811 = vpop.permute.xlu0 %810
        %v812 = vsel %vm761, %v807, %v809
        %v813 = vsel %vm761, %v809, %v811
        %816 = vst [vmem:[#allocation3 + $0x50] sm:$0xff] %v812
        %817 = vst [vmem:[#allocation3 + $0x58] sm:$0xff] %v813
        %v818 = vld [vmem:[#allocation2 + $0x8] sm:$0xff]
        %v819 = vld [vmem:[#allocation2 + $0x10] sm:$0xff]
        %v820 = vld [vmem:[#allocation2 + $0x18] sm:$0xff]
        %821 = vrot.lane.b32.xlu0 %v673, 15
        %v822 = vpop.permute.xlu0 %821
        %823 = vrot.lane.b32.xlu0 %v674, 15
        %v824 = vpop.permute.xlu0 %823
        %v825 = vsel %vm747, %v822, %v824
        %v829 = vmul.f32 %v818, %v822
        %v830 = vmul.f32 %v819, %v825
        %v831 = vmul.f32 %v820, %v824
        %835 = vrot.lane.b32.xlu0 %v829, 113
        %v836 = vpop.permute.xlu0 %835
        %837 = vrot.lane.b32.xlu0 %v830, 113
        %v838 = vpop.permute.xlu0 %837
        %839 = vrot.lane.b32.xlu0 %v831, 113
        %v840 = vpop.permute.xlu0 %839
        %v841 = vsel %vm730, %v836, %v838
        %v842 = vsel %vm730, %v838, %v840
        %845 = vst [vmem:[#allocation3 + $0x60] sm:$0xff] %v841
        %846 = vst [vmem:[#allocation3 + $0x68] sm:$0xff] %v842
        %v847 = vld [vmem:[#allocation2 + $0x8] sm:$0xff]
        %v848 = vld [vmem:[#allocation2 + $0x10] sm:$0xff]
        %v849 = vld [vmem:[#allocation2 + $0x18] sm:$0xff]
        %853 = vrot.lane.b32.xlu0 %v847, 112
        %v854 = vpop.permute.xlu0 %853
        %855 = vrot.lane.b32.xlu0 %v848, 112
        %v856 = vpop.permute.xlu0 %855
        %857 = vrot.lane.b32.xlu0 %v849, 112
        %v858 = vpop.permute.xlu0 %857
        %vm859 = vcmask 916480
        %v860 = vsel %vm859, %v854, %v856
        %v861 = vsel %vm859, %v856, %v858
        %864 = vst [vmem:[#allocation3 + $0x70] sm:$0xff] %v860
        %865 = vst [vmem:[#allocation3 + $0x78] sm:$0xff] %v861
        %v866 = vld [vmem:[#allocation2 + $0x8] sm:$0xff]
        %v867 = vld [vmem:[#allocation2 + $0x10] sm:$0xff]
        %v868 = vld [vmem:[#allocation2 + $0x18] sm:$0xff]
        %869 = vrot.lane.b32.xlu0 %v724, 17
        %v870 = vpop.permute.xlu0 %869
        %871 = vrot.lane.b32.xlu0 %v725, 17
        %v872 = vpop.permute.xlu0 %871
        %v873 = vsel %vm663, %v870, %v872
        %v877 = vmul.f32 %v866, %v870
        %v878 = vmul.f32 %v867, %v873
        %v879 = vmul.f32 %v868, %v872
        %883 = vrot.lane.b32.xlu0 %v877, 111
        %v884 = vpop.permute.xlu0 %883
        %885 = vrot.lane.b32.xlu0 %v878, 111
        %v886 = vpop.permute.xlu0 %885
        %887 = vrot.lane.b32.xlu0 %v879, 111
        %v888 = vpop.permute.xlu0 %887
        %v889 = vsel %vm679, %v884, %v886
        %v890 = vsel %vm679, %v886, %v888
        %893 = vst [vmem:[#allocation3 + $0x80] sm:$0xff] %v889
        %894 = vst [vmem:[#allocation3 + $0x88] sm:$0xff] %v890
        %v895 = vld [vmem:[%s9] sm:$0xff]
        %v896 = vld [vmem:[#allocation3] sm:$0xff]
        %v897 = vld [vmem:[#allocation3 + $0x8] sm:$0xff]
        %v898 = vld [vmem:[#allocation3 + $0x10] sm:$0xff]
        %v899 = vld [vmem:[#allocation3 + $0x18] sm:$0xff]
        %v900 = vld [vmem:[#allocation3 + $0x20] sm:$0xff]
        %v901 = vld [vmem:[#allocation3 + $0x28] sm:$0xff]
        %v902 = vld [vmem:[#allocation3 + $0x30] sm:$0xff]
        %v903 = vld [vmem:[#allocation3 + $0x38] sm:$0xff]
        %v904 = vld [vmem:[#allocation3 + $0x40] sm:$0xff]
        %v905 = vld [vmem:[#allocation3 + $0x48] sm:$0xff]
        %v906 = vld [vmem:[#allocation3 + $0x50] sm:$0xff]
        %v907 = vld [vmem:[#allocation3 + $0x58] sm:$0xff]
        %v908 = vld [vmem:[#allocation3 + $0x60] sm:$0xff]
        %v909 = vld [vmem:[#allocation3 + $0x68] sm:$0xff]
        %v910 = vld [vmem:[#allocation3 + $0x70] sm:$0xff]
        %v911 = vld [vmem:[#allocation3 + $0x78] sm:$0xff]
        %v912 = vld [vmem:[#allocation3 + $0x80] sm:$0xff]
        %v913 = vld [vmem:[#allocation3 + $0x88] sm:$0xff]
        %v914 = vld [vmem:[%s10] sm:$0xff]
        %916 = vset.pattern.permute.xlu0 0
        %917 = vperm.xlu0 %916, %v914
        %v918 = vpop.permute.xlu0 %917
        %vm920 = vcmask 588800
        %v922 = vsel %vm920, %v895, 0
        %924 = vmatpush.msra.mxu0 0.0
        %925 = vmatpush.msra.mxu0 0.0
        %926 = vmatpush.msra.mxu0 0.0
        %927 = vmatpush.msra.mxu0 0.0
        %928 = vmatpush.msra.mxu0 0.0
        %929 = vmatpush.msra.mxu0 0.0
        %930 = vmatpush.msra.mxu0 0.0
        %931 = vmatpush.msra.mxu0 %v912
        %932 = vmatpush.msra.mxu0 %v910
        %933 = vmatpush.msra.mxu0 %v908
        %934 = vmatpush.msra.mxu0 %v906
        %935 = vmatpush.msra.mxu0 %v904
        %936 = vmatpush.msra.mxu0 %v902
        %937 = vmatpush.msra.mxu0 %v900
        %938 = vmatpush.msra.mxu0 %v898
        %939 = vmatpush.msra.mxu0 %v896
        %940 = vmatmul.f32.gmra.mxu0 %v922
        %v941 = vpop.f32.mrf.mxu0
        %v942 = vadd.f32 %v918, %v941
        %943 = vdwg.mxu0
        %944 = vmatpush.msra.mxu0 0.0
        %945 = vmatpush.msra.mxu0 0.0
        %946 = vmatpush.msra.mxu0 0.0
        %947 = vmatpush.msra.mxu0 0.0
        %948 = vmatpush.msra.mxu0 0.0
        %949 = vmatpush.msra.mxu0 0.0
        %950 = vmatpush.msra.mxu0 0.0
        %951 = vmatpush.msra.mxu0 %v913
        %952 = vmatpush.msra.mxu0 %v911
        %953 = vmatpush.msra.mxu0 %v909
        %954 = vmatpush.msra.mxu0 %v907
        %955 = vmatpush.msra.mxu0 %v905
        %956 = vmatpush.msra.mxu0 %v903
        %957 = vmatpush.msra.mxu0 %v901
        %958 = vmatpush.msra.mxu0 %v899
        %959 = vmatpush.msra.mxu0 %v897
        %960 = vmatmul.f32.gmra.mxu0 %v922
        %v961 = vpop.f32.mrf.mxu0
        %v962 = vadd.f32 %v918, %v961
        %963 = vdwg.mxu0
        %vm964 = vcmp.ge.f32.partialorder %v942, 0.0
        %vm965 = vcmp.ge.f32.partialorder %v962, 0.0
        %v966 = vmul.f32 %v942, 0.01
        %v967 = vmul.f32 %v962, 0.01
        %v968 = vsel %vm964, %v942, %v966
        %v969 = vsel %vm965, %v962, %v967
        %v970 = vadd.f32 %v547, %v968
        %v971 = vadd.f32 %v548, %v969
        %v972 = vld [vmem:[%s11] sm:$0xff]
        %v973 = vld [vmem:[%s11 + $0x8] sm:$0xff]
        %v974 = vld [vmem:[%s12] sm:$0xff]
        %v975 = vld [vmem:[%s12 + $0x8] sm:$0xff]
        %v977 = vsel %vm612, %v974, 0
        %v980 = vsel %vm612, %v975, 0
        %982 = vmatpush.msra.mxu0 0.0
        %983 = vmatpush.msra.mxu0 0.0
        %984 = vmatpush.msra.mxu0 0.0
        %985 = vmatpush.msra.mxu0 0.0
        %986 = vmatpush.msra.mxu0 0.0
        %987 = vmatpush.msra.mxu0 0.0
        %988 = vmatpush.msra.mxu0 0.0
        %989 = vmatpush.msra.mxu0 0.0
        %990 = vmatpush.msra.mxu0 0.0
        %991 = vmatpush.msra.mxu0 0.0
        %992 = vmatpush.msra.mxu0 0.0
        %993 = vmatpush.msra.mxu0 0.0
        %994 = vmatpush.msra.mxu0 0.0
        %995 = vmatpush.msra.mxu0 0.0
        %996 = vmatpush.msra.mxu0 0.0
        %997 = vmatpush.msra.mxu0 %v603
        %998 = vmatmul.f32.gmra.mxu0 %v977
        %v999 = vpop.f32.mrf.mxu0
        %v1000 = vadd.f32 0.0, %v999
        %1001 = vmatmul.f32.gmra.mxu0 %v980
        %v1002 = vpop.f32.mrf.mxu0
        %v1003 = vadd.f32 0.0, %v1002
        %1004 = vdwg.mxu0
        %1005 = vmatpush.msra.mxu0 0.0
        %1006 = vmatpush.msra.mxu0 0.0
        %1007 = vmatpush.msra.mxu0 0.0
        %1008 = vmatpush.msra.mxu0 0.0
        %1009 = vmatpush.msra.mxu0 0.0
        %1010 = vmatpush.msra.mxu0 0.0
        %1011 = vmatpush.msra.mxu0 0.0
        %1012 = vmatpush.msra.mxu0 0.0
        %1013 = vmatpush.msra.mxu0 0.0
        %1014 = vmatpush.msra.mxu0 0.0
        %1015 = vmatpush.msra.mxu0 0.0
        %1016 = vmatpush.msra.mxu0 0.0
        %1017 = vmatpush.msra.mxu0 0.0
        %1018 = vmatpush.msra.mxu0 0.0
        %1019 = vmatpush.msra.mxu0 0.0
        %1020 = vmatpush.msra.mxu0 %v604
        %1021 = vmatmul.f32.gmra.mxu0 %v977
        %v1022 = vpop.f32.mrf.mxu0
        %v1023 = vadd.f32 0.0, %v1022
        %1024 = vmatmul.f32.gmra.mxu0 %v980
        %v1025 = vpop.f32.mrf.mxu0
        %v1026 = vadd.f32 0.0, %v1025
        %1027 = vdwg.mxu0
        %v1029 = vsel %vm612, %v972, 0
        %v1032 = vsel %vm612, %v973, 0
        %1034 = vmatpush.msra.mxu0 0.0
        %1035 = vmatpush.msra.mxu0 0.0
        %1036 = vmatpush.msra.mxu0 0.0
        %1037 = vmatpush.msra.mxu0 0.0
        %1038 = vmatpush.msra.mxu0 0.0
        %1039 = vmatpush.msra.mxu0 0.0
        %1040 = vmatpush.msra.mxu0 0.0
        %1041 = vmatpush.msra.mxu0 0.0
        %1042 = vmatpush.msra.mxu0 0.0
        %1043 = vmatpush.msra.mxu0 0.0
        %1044 = vmatpush.msra.mxu0 0.0
        %1045 = vmatpush.msra.mxu0 0.0
        %1046 = vmatpush.msra.mxu0 0.0
        %1047 = vmatpush.msra.mxu0 0.0
        %1048 = vmatpush.msra.mxu0 0.0
        %1049 = vmatpush.msra.mxu0 %v970
        %1050 = vmatmul.f32.gmra.mxu0 %v1029
        %v1051 = vpop.f32.mrf.mxu0
        %v1052 = vadd.f32 %v1000, %v1051
        %1053 = vmatmul.f32.gmra.mxu0 %v1032
        %v1054 = vpop.f32.mrf.mxu0
        %v1055 = vadd.f32 %v1003, %v1054
        %1056 = vdwg.mxu0
        %1057 = vmatpush.msra.mxu0 0.0
        %1058 = vmatpush.msra.mxu0 0.0
        %1059 = vmatpush.msra.mxu0 0.0
        %1060 = vmatpush.msra.mxu0 0.0
        %1061 = vmatpush.msra.mxu0 0.0
        %1062 = vmatpush.msra.mxu0 0.0
        %1063 = vmatpush.msra.mxu0 0.0
        %1064 = vmatpush.msra.mxu0 0.0
        %1065 = vmatpush.msra.mxu0 0.0
        %1066 = vmatpush.msra.mxu0 0.0
        %1067 = vmatpush.msra.mxu0 0.0
        %1068 = vmatpush.msra.mxu0 0.0
        %1069 = vmatpush.msra.mxu0 0.0
        %1070 = vmatpush.msra.mxu0 0.0
        %1071 = vmatpush.msra.mxu0 0.0
        %1072 = vmatpush.msra.mxu0 %v971
        %1073 = vmatmul.f32.gmra.mxu0 %v1029
        %v1074 = vpop.f32.mrf.mxu0
        %v1075 = vadd.f32 %v1023, %v1074
        %1076 = vmatmul.f32.gmra.mxu0 %v1032
        %v1077 = vpop.f32.mrf.mxu0
        %v1078 = vadd.f32 %v1026, %v1077
        %1079 = vdwg.mxu0
        %v1080 = vld [vmem:[%s13] sm:$0xff]
        %v1081 = vld [vmem:[%s13 + $0x8] sm:$0xff]
        %1083 = vset.pattern.permute.xlu0 0
        %1084 = vperm.xlu0 %1083, %v1080
        %v1085 = vpop.permute.xlu0 %1084
        %1088 = vset.pattern.permute.xlu0 0
        %1089 = vperm.xlu0 %1088, %v1081
        %v1090 = vpop.permute.xlu0 %1089
        %v1092 = vadd.f32 %v1052, %v1085
        %v1093 = vadd.f32 %v1075, %v1085
        %v1094 = vadd.f32 %v1055, %v1090
        %v1095 = vadd.f32 %v1078, %v1090
        %vm1096 = vcmp.ge.f32.partialorder %v1092, 0.0
        %vm1097 = vcmp.ge.f32.partialorder %v1093, 0.0
        %vm1098 = vcmp.ge.f32.partialorder %v1094, 0.0
        %vm1099 = vcmp.ge.f32.partialorder %v1095, 0.0
        %v1100 = vmul.f32 %v1092, 0.01
        %v1101 = vmul.f32 %v1093, 0.01
        %v1102 = vmul.f32 %v1094, 0.01
        %v1103 = vmul.f32 %v1095, 0.01
        %v1104 = vsel %vm1096, %v1092, %v1100
        %v1105 = vsel %vm1097, %v1093, %v1101
        %v1106 = vsel %vm1098, %v1094, %v1102
        %v1107 = vsel %vm1099, %v1095, %v1103
        %1108 = vst [vmem:[%s487] sm:$0xff] %v1104
        %1109 = vst [vmem:[%s487 + $0x8] sm:$0xff] %v1105
        %1110 = vst [vmem:[%s487 + $0x10] sm:$0xff] %v1106
        %1111 = vst [vmem:[%s487 + $0x18] sm:$0xff] %v1107
        %s1112 = sand.u32 %s338, 1
        %s1113 = scalar_lea.sflag [#allocation6], %s1112
        %s1114 = sand.u32 %s338, 1
        %s1115 = smul.addr %s1114, 32
        %s1116 = scalar_lea.vmem [#allocation7], %s1115
        // Predicated region
        $region81: #{tpu_custom_call.1} parent=75 // pred_check
          %p1117 = pneg %p348
        $region82: #{tpu_custom_call.1} parent=75 // pred_check_branch
          %1119 = sbr.rel (%p1117) target = $region84
        $region83: #{tpu_custom_call.1} parent=75 // pred_region
          %1121 = vsyncadd %s1113, 0
          %s1122 = smul.addr %s31, 4
          %s1123 = smul.addr %s1122, 8
          %s1124 = scalar_lea.hbm %s14, %s1123
          %s1125 = sshll.u32 %s1116, 4
          %s1126 = int_to_ptr.vmem [resolvable:$true] %s1125
          %s1127 = sshll.u32 %s1124, 4
          %s1128 = int_to_ptr.hbm [resolvable:$true] %s1127
          %1133 = dma.vmem_to_hbm [thread:$0]  %s1126, 512, %s1128, %s1113, 256, 256, 16
        $region84: #{tpu_custom_call.1} parent=75 // pred_fallthru
          _
      $region76: #{tpu_custom_call.1} parent=5 // pred_fallthru
        _
      %p1134 = scmp.le.s32.totalorder 2, %s26
      // Predicated region
      $region85: #{tpu_custom_call.1} parent=5 // pred_check
        %p1135 = pneg %p1134
      $region86: #{tpu_custom_call.1} parent=5 // pred_check_branch
        %1137 = sbr.rel (%p1135) target = $region88
      $region87: #{tpu_custom_call.1} parent=5 // pred_region
        %s1138 = ssub.s32 %s26, 2
        // Predicated region
        $region89: #{tpu_custom_call.1} parent=87 // pred_check
          %p1139 = pneg %p354
        $region90: #{tpu_custom_call.1} parent=87 // pred_check_branch
          %1141 = sbr.rel (%p1139) target = $region92
        $region91: #{tpu_custom_call.1} parent=87 // pred_region
          %s1142 = sand.u32 %s339, 1
          %s1143 = scalar_lea.sflag [#allocation6], %s1142
          %s1144 = sand.u32 %s339, 1
          %s1145 = smul.addr %s1144, 32
          %s1146 = scalar_lea.vmem [#allocation7], %s1145
          %1148 = dma.done %s1143, 512
        $region92: #{tpu_custom_call.1} parent=87 // pred_fallthru
          _
      $region88: #{tpu_custom_call.1} parent=5 // pred_fallthru
        _
    $region6: #{tpu_custom_call.1} parent=1 // loop_footer
      %s30 = sadd.s32 1, %s26
    $region7: #{tpu_custom_call.1} parent=1 // loop_footer_branch
      %25 = sbr.rel target = $region3
    $region8: #{tpu_custom_call.1} parent=1 // loop_exit
      _
    %1149 = vsyncpa [#allocation5], 1
    %s1150 = scalar_lea.sflag [#allocation5], 1
    %1151 = vsyncpa %s1150, 1
    %1152 = vsyncpa [#allocation6], 1
    %s1153 = scalar_lea.sflag [#allocation6], 1
    %1154 = vsyncpa %s1153, 1

</llo_original>
